<compile_context>
chip_gen: v5e
topology: v5e:2x2
jax: 0.10.0
libtpu: 0.0.40
codegen_flags: <defaults>
</compile_context>

<pallas_src>
import math

import jax
import jax.numpy as jnp
from jax.experimental import pallas as pl
from jax.experimental.pallas import tpu as pltpu


# ---------------------------------------------------------------------------
# Kernel
# ---------------------------------------------------------------------------
def regressor_kernel(x_ref, p_ref,
                     wpe_ref, bpe_ref,
                     w1x_ref, w1e_ref, b1_ref,
                     w2_ref, b2_ref,
                     o_ref):
    """One batch tile.

    x_ref  : (TB, F)  f32   (channel dim of the (B,1,F) input squeezed away)
    p_ref  : (1, TB)  f32   lane-dense transform parameter
    wpe_ref: (E, 1)   f32   param_encoder Linear(1,E).weight (column)
    bpe_ref: (E, 1)   f32   param_encoder bias (column)
    w1x_ref: (H, F)   bf16  Linear(F+E,H).weight[:, :F]
    w1e_ref: (H, E)   bf16  Linear(F+E,H).weight[:, F:]
    b1_ref : (H, 1)   f32
    w2_ref : (O, H)   bf16  Linear(H,O).weight
    b2_ref : (O, 1)   f32
    o_ref  : (O, TB)  f32   transposed, lane-dense output tile
    """
    # --- param encoder, lane-dense & transposed: embT = relu(wpe*p + bpe) ---
    # (E,1)*(1,TB) broadcast -> (E,TB): batch sits on the 128-lane axis, so the
    # VPU runs at full width (vs. 32/128 lanes in the (TB,E) orientation).
    embT = jnp.maximum(wpe_ref[...] * p_ref[...] + bpe_ref[...], 0.0)    # (E,TB) f32

    # --- layer 1: two accumulating MXU dots (no concat, no x round trips) ---
    x_bf = x_ref[...].astype(jnp.bfloat16)                               # single cast pass
    ht = (jnp.einsum('hf,bf->hb', w1x_ref[...], x_bf,
                     preferred_element_type=jnp.float32)
          + jnp.einsum('he,eb->hb', w1e_ref[...], embT.astype(jnp.bfloat16),
                       preferred_element_type=jnp.float32))              # (H,TB) f32
    ht = jnp.maximum(ht + b1_ref[...], 0.0)                              # bias + ReLU, f32 VPU

    # --- layer 2 (output_activation=None), lane-dense (O,TB) store ---
    ot = jnp.einsum('oh,hb->ob', w2_ref[...], ht.astype(jnp.bfloat16),
                    preferred_element_type=jnp.float32)                  # (O,TB) f32
    o_ref[...] = (ot + b2_ref[...]).astype(o_ref.dtype)


# ---------------------------------------------------------------------------
# Wrapper
# ---------------------------------------------------------------------------
def _round_up(n, m):
    return ((n + m - 1) // m) * m


def _choose_tile(batch, cap):
    """Adaptive batch tile.

    * batch <= cap : single grid step, blocks == full arrays (no padding).
    * batch  > cap : >= 2 steps, step count rounded up to an even number so
      the "parallel" grid axis shards across v7x's two TensorCores; TB is a
      multiple of 256 and <= cap.
    """
    batch = max(int(batch), 1)
    if _round_up(batch, 256) <= cap:
        return batch                       # one step; full-array blocks
    n_steps = pl.cdiv(_round_up(batch, 256), cap)
    n_steps += n_steps & 1                 # even step count (v7x megacore)
    tb = _round_up(pl.cdiv(batch, n_steps), 256)
    return min(tb, cap)


def regressor_forward(x_ncl, param, params, *, block_batch_cap=4096):
    """x_ncl: (B, 1, F) f32, param: (B, 1) f32 -> (B, n_outputs) f32."""
    B, C, F = x_ncl.shape
    assert C == 1
    E = params["wpe"].shape[0]
    H = params["w1x"].shape[0]
    O = params["w2"].shape[0]
    assert params["w1x"].shape[1] == F and params["w1e"].shape[1] == E

    TB = _choose_tile(B, block_batch_cap)
    n_blk = pl.cdiv(B, TB)
    Bp = n_blk * TB                        # out_shape padded to whole tiles

    # Free re-layouts only: (B,1) -> (1,B) so the encoder is lane-dense, and
    # few-KB bf16 casts of the MXU weight operands (params stay f32).
    p_row = jnp.reshape(param, (1, B))
    w1x_bf = params["w1x"].astype(jnp.bfloat16)
    w1e_bf = params["w1e"].astype(jnp.bfloat16)
    w2_bf = params["w2"].astype(jnp.bfloat16)

    def const_spec(shape):                 # VMEM-resident weights, fetched once
        return pl.BlockSpec(shape, lambda i, _s=shape: (0,) * len(_s))

    out_t = pl.pallas_call(
        regressor_kernel,
        out_shape=jax.ShapeDtypeStruct((O, Bp), jnp.float32),   # lane-dense (O, B)
        grid_spec=pltpu.PrefetchScalarGridSpec(
            num_scalar_prefetch=0,
            grid=(n_blk,),
            in_specs=[
                # (B,1,F) fed directly; channel dim squeezed by the BlockSpec.
                pl.BlockSpec((TB, None, F), lambda i: (i, 0, 0)),   # x (f32 stream)
                pl.BlockSpec((1, TB), lambda i: (0, i)),            # param, lane-dense
                const_spec((E, 1)),                                 # wpe
                const_spec((E, 1)),                                 # bpe
                const_spec((H, F)),                                 # w1 (x part)
                const_spec((H, E)),                                 # w1 (emb part)
                const_spec((H, 1)),                                 # b1 (column)
                const_spec((O, H)),                                 # w2
                const_spec((O, 1)),                                 # b2 (column)
            ],
            out_specs=pl.BlockSpec((O, TB), lambda i: (0, i)),
        ),
        compiler_params=pltpu.CompilerParams(
            dimension_semantics=("parallel",)),
    )(x_ncl, p_row,
      params["wpe"], params["bpe"],
      w1x_bf, w1e_bf, params["b1"],
      w2_bf, params["b2"])

    # Drop the tile-padding columns (garbage from the boundary block) and
    # return the module's (B, n_outputs) orientation; the (O,B) transpose is
    # tiny and ideally fused into the consumer.
    return out_t[:, :B].T


# ---------------------------------------------------------------------------
# Parameters (nn.Linear-style init, f32, PyTorch (out, in) layout)
# ---------------------------------------------------------------------------
def _uniform(key, shape, fan_in):
    bound = 1.0 / math.sqrt(fan_in)
    return jax.random.uniform(key, shape, jnp.float32, -bound, bound)


def make_params(key, in_features, emb_dim, hidden, n_outputs):
    k = jax.random.split(key, 7)
    K = in_features + emb_dim
    return {
        "wpe": _uniform(k[0], (emb_dim, 1), 1),             # Linear(1,E).weight
        "bpe": _uniform(k[1], (emb_dim, 1), 1),              # Linear(1,E).bias (column)
        "w1x": _uniform(k[2], (hidden, in_features), K),     # Linear(K,H).weight[:, :F]
        "w1e": _uniform(k[3], (hidden, emb_dim), K),          # Linear(K,H).weight[:, F:]
        "b1":  _uniform(k[4], (hidden, 1), K),
        "w2":  _uniform(k[5], (n_outputs, hidden), hidden),  # Linear(H,O).weight
        "b2":  _uniform(k[6], (n_outputs, 1), hidden),
    }


# ---------------------------------------------------------------------------
# Plain-JAX reference (mirrors the module, with the same bf16 MXU operands)
# ---------------------------------------------------------------------------
def reference_forward(x_ncl, param, params):
    bf = jnp.bfloat16
    x = x_ncl[:, 0, :]                                                   # squeeze(1)
    emb = jnp.maximum(param * params["wpe"][:, 0] + params["bpe"][:, 0], 0.0)
    h = (jnp.einsum('bf,hf->bh', x.astype(bf), params["w1x"].astype(bf),
                    preferred_element_type=jnp.float32)
         + jnp.einsum('be,he->bh', emb.astype(bf), params["w1e"].astype(bf),
                      preferred_element_type=jnp.float32))
    h = jnp.maximum(h + params["b1"][:, 0], 0.0)
    out = jnp.einsum('bh,oh->bo', h.astype(bf), params["w2"].astype(bf),
                     preferred_element_type=jnp.float32) + params["b2"][:, 0]
    return out


# ---------------------------------------------------------------------------
# Self-test
# ---------------------------------------------------------------------------
if __name__ == "__main__":
    F, E, H, O = 32, 32, 64, 4
    key = jax.random.PRNGKey(0)
    kx, kp, kw = jax.random.split(key, 3)
    params = make_params(kw, F, E, H, O)

    # 1) Small batch -> single grid step with full-array blocks (no padding,
    #    no slicing): the regime the review prescribes for small B.
    B1 = 300
    x1 = jax.random.normal(jax.random.fold_in(kx, 0), (B1, 1, F), jnp.float32)
    p1 = jax.random.normal(jax.random.fold_in(kp, 0), (B1, 1), jnp.float32)
    out1 = jax.block_until_ready(regressor_forward(x1, p1, params))
    ref1 = reference_forward(x1, p1, params)
    assert out1.shape == (B1, O), out1.shape
    err1 = float(jnp.max(jnp.abs(out1 - ref1)))
    assert jnp.allclose(out1, ref1, atol=2e-3, rtol=2e-3), err1

    # 2) Force a tiny tile cap so the multi-step pipelined path (3 grid steps,
    #    partial boundary block handled via padded out_shape + slicing, no
    #    input padding) is exercised at small shapes.
    B2 = 640
    x2 = jax.random.normal(jax.random.fold_in(kx, 1), (B2, 1, F), jnp.float32)
    p2 = jax.random.normal(jax.random.fold_in(kp, 1), (B2, 1), jnp.float32)
    out2 = jax.block_until_ready(
        regressor_forward(x2, p2, params, block_batch_cap=256))
    ref2 = reference_forward(x2, p2, params)
    assert out2.shape == (B2, O), out2.shape
    err2 = float(jnp.max(jnp.abs(out2 - ref2)))
    assert jnp.allclose(out2, ref2, atol=2e-3, rtol=2e-3), err2

    print("KERNEL_OK")
</pallas_src>

<mosaic_0001>
module attributes {stable_mosaic.version = 11 : i64} {
  func.func @regressor_kernel(%arg0: i32, %arg1: memref<300x1x32xf32, #tpu.memory_space<vmem>>, %arg2: memref<1x300xf32, #tpu.memory_space<vmem>>, %arg3: memref<32x1xf32, #tpu.memory_space<vmem>>, %arg4: memref<32x1xf32, #tpu.memory_space<vmem>>, %arg5: memref<64x32xbf16, #tpu.memory_space<vmem>>, %arg6: memref<64x32xbf16, #tpu.memory_space<vmem>>, %arg7: memref<64x1xf32, #tpu.memory_space<vmem>>, %arg8: memref<4x64xbf16, #tpu.memory_space<vmem>>, %arg9: memref<4x1xf32, #tpu.memory_space<vmem>>, %arg10: memref<4x300xf32, #tpu.memory_space<vmem>>) attributes {dimension_semantics = [#tpu.dimension_semantics<parallel>], iteration_bounds = array<i64: 1>, scalar_prefetch = 0 : i64, scratch_operands = 0 : i64, tpu.core_type = #tpu.core_type<tc>, window_params = [{transform_indices = @transform_0, window_bounds = array<i64: 300, 1, 32>}, {transform_indices = @transform_1, window_bounds = array<i64: 1, 300>}, {pipeline_mode = #tpu.pipeline_mode<synchronous>, transform_indices = @transform_2, window_bounds = array<i64: 32, 1>}, {pipeline_mode = #tpu.pipeline_mode<synchronous>, transform_indices = @transform_3, window_bounds = array<i64: 32, 1>}, {pipeline_mode = #tpu.pipeline_mode<synchronous>, transform_indices = @transform_4, window_bounds = array<i64: 64, 32>}, {pipeline_mode = #tpu.pipeline_mode<synchronous>, transform_indices = @transform_5, window_bounds = array<i64: 64, 32>}, {pipeline_mode = #tpu.pipeline_mode<synchronous>, transform_indices = @transform_6, window_bounds = array<i64: 64, 1>}, {pipeline_mode = #tpu.pipeline_mode<synchronous>, transform_indices = @transform_7, window_bounds = array<i64: 4, 64>}, {pipeline_mode = #tpu.pipeline_mode<synchronous>, transform_indices = @transform_8, window_bounds = array<i64: 4, 1>}, {transform_indices = @transform_9, window_bounds = array<i64: 4, 300>}]} {
    %c0 = arith.constant 0 : index
    %c0_0 = arith.constant 0 : index
    %0 = vector.load %arg3[%c0, %c0_0] : memref<32x1xf32, #tpu.memory_space<vmem>>, vector<32x1xf32>
    %c0_1 = arith.constant 0 : index
    %c0_2 = arith.constant 0 : index
    %1 = vector.load %arg2[%c0_1, %c0_2] : memref<1x300xf32, #tpu.memory_space<vmem>>, vector<1x300xf32>
    %2 = vector.broadcast %0 : vector<32x1xf32> to vector<32x300xf32>
    %3 = vector.broadcast %1 : vector<1x300xf32> to vector<32x300xf32>
    %4 = arith.mulf %2, %3 : vector<32x300xf32>
    %c0_3 = arith.constant 0 : index
    %c0_4 = arith.constant 0 : index
    %5 = vector.load %arg4[%c0_3, %c0_4] : memref<32x1xf32, #tpu.memory_space<vmem>>, vector<32x1xf32>
    %6 = vector.broadcast %5 : vector<32x1xf32> to vector<32x300xf32>
    %7 = arith.addf %4, %6 : vector<32x300xf32>
    %cst = arith.constant 0.000000e+00 : f32
    %8 = vector.broadcast %cst : f32 to vector<32x300xf32>
    %9 = arith.maximumf %7, %8 : vector<32x300xf32>
    %c0_5 = arith.constant 0 : index
    %c0_6 = arith.constant 0 : index
    %c0_7 = arith.constant 0 : index
    %10 = vector.load %arg1[%c0_5, %c0_6, %c0_7] : memref<300x1x32xf32, #tpu.memory_space<vmem>>, vector<300x1x32xf32>
    %11 = vector.shape_cast %10 : vector<300x1x32xf32> to vector<300x32xf32>
    %12 = arith.truncf %11 : vector<300x32xf32> to vector<300x32xbf16>
    %c0_8 = arith.constant 0 : index
    %c0_9 = arith.constant 0 : index
    %13 = vector.load %arg5[%c0_8, %c0_9] : memref<64x32xbf16, #tpu.memory_space<vmem>>, vector<64x32xbf16>
    "tpu.trace_start"() <{level = 10 : i32, message = "hf,bf->hb"}> : () -> ()
    %cst_10 = arith.constant dense<0.000000e+00> : vector<64x300xf32>
    %14 = tpu.matmul %13, %12, %cst_10 {dimension_numbers = #tpu.dot_dimension_numbers<[1], [1], [0], [0], [0, 0, 1, 0], [], []>} : vector<64x32xbf16>, vector<300x32xbf16>, vector<64x300xf32> -> vector<64x300xf32>
    "tpu.trace_stop"() : () -> ()
    %c0_11 = arith.constant 0 : index
    %c0_12 = arith.constant 0 : index
    %15 = vector.load %arg6[%c0_11, %c0_12] : memref<64x32xbf16, #tpu.memory_space<vmem>>, vector<64x32xbf16>
    %16 = arith.truncf %9 : vector<32x300xf32> to vector<32x300xbf16>
    "tpu.trace_start"() <{level = 10 : i32, message = "he,eb->hb"}> : () -> ()
    %cst_13 = arith.constant dense<0.000000e+00> : vector<64x300xf32>
    %17 = tpu.matmul %15, %16, %cst_13 {dimension_numbers = #tpu.dot_dimension_numbers<[1], [0], [0], [1], [0, 0, 1, 1], [], []>} : vector<64x32xbf16>, vector<32x300xbf16>, vector<64x300xf32> -> vector<64x300xf32>
    "tpu.trace_stop"() : () -> ()
    %18 = arith.addf %14, %17 : vector<64x300xf32>
    %c0_14 = arith.constant 0 : index
    %c0_15 = arith.constant 0 : index
    %19 = vector.load %arg7[%c0_14, %c0_15] : memref<64x1xf32, #tpu.memory_space<vmem>>, vector<64x1xf32>
    %20 = vector.broadcast %19 : vector<64x1xf32> to vector<64x300xf32>
    %21 = arith.addf %18, %20 : vector<64x300xf32>
    %cst_16 = arith.constant 0.000000e+00 : f32
    %22 = vector.broadcast %cst_16 : f32 to vector<64x300xf32>
    %23 = arith.maximumf %21, %22 : vector<64x300xf32>
    %c0_17 = arith.constant 0 : index
    %c0_18 = arith.constant 0 : index
    %24 = vector.load %arg8[%c0_17, %c0_18] : memref<4x64xbf16, #tpu.memory_space<vmem>>, vector<4x64xbf16>
    %25 = arith.truncf %23 : vector<64x300xf32> to vector<64x300xbf16>
    "tpu.trace_start"() <{level = 10 : i32, message = "oh,hb->ob"}> : () -> ()
    %cst_19 = arith.constant dense<0.000000e+00> : vector<4x300xf32>
    %26 = tpu.matmul %24, %25, %cst_19 {dimension_numbers = #tpu.dot_dimension_numbers<[1], [0], [0], [1], [0, 0, 1, 1], [], []>} : vector<4x64xbf16>, vector<64x300xbf16>, vector<4x300xf32> -> vector<4x300xf32>
    "tpu.trace_stop"() : () -> ()
    %c0_20 = arith.constant 0 : index
    %c0_21 = arith.constant 0 : index
    %27 = vector.load %arg9[%c0_20, %c0_21] : memref<4x1xf32, #tpu.memory_space<vmem>>, vector<4x1xf32>
    %28 = vector.broadcast %27 : vector<4x1xf32> to vector<4x300xf32>
    %29 = arith.addf %26, %28 : vector<4x300xf32>
    %c0_22 = arith.constant 0 : index
    %c0_23 = arith.constant 0 : index
    %30 = vector.load %arg10[%c0_22, %c0_23] : memref<4x300xf32, #tpu.memory_space<vmem>>, vector<4x300xf32>
    tpu.vector_store %arg10[%c0_22, %c0_23], %29 {strides = array<i32>} : memref<4x300xf32, #tpu.memory_space<vmem>>, vector<4x300xf32>,
    return
  }
  func.func @transform_0(%arg0: i32) -> (i32, i32, i32) {
    %c0_i32 = arith.constant 0 : i32
    %c0_i32_0 = arith.constant 0 : i32
    %c0_i32_1 = arith.constant 0 : i32
    return %arg0, %c0_i32, %c0_i32_0 : i32, i32, i32
  }
  func.func @transform_1(%arg0: i32) -> (i32, i32) {
    %c0_i32 = arith.constant 0 : i32
    %c0_i32_0 = arith.constant 0 : i32
    return %c0_i32, %arg0 : i32, i32
  }
  func.func @transform_2(%arg0: i32) -> (i32, i32) {
    %c0_i32 = arith.constant 0 : i32
    %c0_i32_0 = arith.constant 0 : i32
    %c0_i32_1 = arith.constant 0 : i32
    return %c0_i32, %c0_i32_0 : i32, i32
  }
  func.func @transform_3(%arg0: i32) -> (i32, i32) {
    %c0_i32 = arith.constant 0 : i32
    %c0_i32_0 = arith.constant 0 : i32
    %c0_i32_1 = arith.constant 0 : i32
    return %c0_i32, %c0_i32_0 : i32, i32
  }
  func.func @transform_4(%arg0: i32) -> (i32, i32) {
    %c0_i32 = arith.constant 0 : i32
    %c0_i32_0 = arith.constant 0 : i32
    %c0_i32_1 = arith.constant 0 : i32
    return %c0_i32, %c0_i32_0 : i32, i32
  }
  func.func @transform_5(%arg0: i32) -> (i32, i32) {
    %c0_i32 = arith.constant 0 : i32
    %c0_i32_0 = arith.constant 0 : i32
    %c0_i32_1 = arith.constant 0 : i32
    return %c0_i32, %c0_i32_0 : i32, i32
  }
  func.func @transform_6(%arg0: i32) -> (i32, i32) {
    %c0_i32 = arith.constant 0 : i32
    %c0_i32_0 = arith.constant 0 : i32
    %c0_i32_1 = arith.constant 0 : i32
    return %c0_i32, %c0_i32_0 : i32, i32
  }
  func.func @transform_7(%arg0: i32) -> (i32, i32) {
    %c0_i32 = arith.constant 0 : i32
    %c0_i32_0 = arith.constant 0 : i32
    %c0_i32_1 = arith.constant 0 : i32
    return %c0_i32, %c0_i32_0 : i32, i32
  }
  func.func @transform_8(%arg0: i32) -> (i32, i32) {
    %c0_i32 = arith.constant 0 : i32
    %c0_i32_0 = arith.constant 0 : i32
    %c0_i32_1 = arith.constant 0 : i32
    return %c0_i32, %c0_i32_0 : i32, i32
  }
  func.func @transform_9(%arg0: i32) -> (i32, i32) {
    %c0_i32 = arith.constant 0 : i32
    %c0_i32_0 = arith.constant 0 : i32
    return %c0_i32, %arg0 : i32, i32
  }
}

</mosaic_0001>

<llo_original>
// kernel: tpu_custom_call.1
$region0: #{tpu_custom_call.1}
  #allocation0 [shape = 'u32[]', space=smem, size = 0x4, offset = 0x4, fixed_abs, tag = 'smem constant byte address 0x4 - core index']
  #allocation1 [shape = 'u32[72,128]{1,0:T(1,128)}', space=vmem, size = 0x9000, scoped, tag = 'internal scratch']
  %s0 = inlined_call_operand.vmem [shape: f32[300,1,32], index: 0, kind: input, shape index: {}]
  %s1 = inlined_call_operand.vmem [shape: f32[1,300], index: 1, kind: input, shape index: {}]
  %s2 = inlined_call_operand.vmem [shape: f32[32,1], index: 2, kind: input, shape index: {}]
  %s3 = inlined_call_operand.vmem [shape: f32[32,1], index: 3, kind: input, shape index: {}]
  %s4 = inlined_call_operand.vmem [shape: bf16[64,32], index: 4, kind: input, shape index: {}]
  %s5 = inlined_call_operand.vmem [shape: bf16[64,32], index: 5, kind: input, shape index: {}]
  %s6 = inlined_call_operand.vmem [shape: f32[64,1], index: 6, kind: input, shape index: {}]
  %s7 = inlined_call_operand.vmem [shape: bf16[4,64], index: 7, kind: input, shape index: {}]
  %s8 = inlined_call_operand.vmem [shape: f32[4,1], index: 8, kind: input, shape index: {}]
  %s9 = inlined_call_operand.hbm [shape: f32[4,300], index: 9, kind: output, shape index: {}]
  %s10 = sld [smem:[#allocation0]]
  $region46: #{tpu_custom_call.1} parent=0
    _
  %s12 = ssub.s32 1, %s10
  %s13 = scalar_select 0, %s12, %s10
  $region1: #{tpu_custom_call.1} parent=0
    #allocation2 [shape = 'u8[6144]{0}', space=vmem, size = 0x1800, scoped, tag = 'output window, operand 0, single buffered']
    #allocation3 [shape = 's32[1]{0}', space=sflag, size = 0x4, scoped, tag = 'scoped memory for tpu_custom_call.1']
    %14 = vsyncpa [#allocation3], 0
    // Predicated region
    $region2: #{tpu_custom_call.1} parent=1 // pred_check
      _
    $region3: #{tpu_custom_call.1} parent=1 // pred_check_branch
      %16 = sbr.rel (0) target = $region5
    $region4: #{tpu_custom_call.1} parent=1 // pred_region
      _
    $region5: #{tpu_custom_call.1} parent=1 // pred_fallthru
      _
    // Predicated region
    $region6: #{tpu_custom_call.1} parent=1 // pred_check
      _
    $region7: #{tpu_custom_call.1} parent=1 // pred_check_branch
      %18 = sbr.rel (0) target = $region9
    $region8: #{tpu_custom_call.1} parent=1 // pred_region
      _
    $region9: #{tpu_custom_call.1} parent=1 // pred_fallthru
      _
    // Predicated region
    $region10: #{tpu_custom_call.1} parent=1 // pred_check
      _
    $region11: #{tpu_custom_call.1} parent=1 // pred_check_branch
      %20 = sbr.rel (0) target = $region13
    $region12: #{tpu_custom_call.1} parent=1 // pred_region
      _
    $region13: #{tpu_custom_call.1} parent=1 // pred_fallthru
      _
    // Predicated region
    $region14: #{tpu_custom_call.1} parent=1 // pred_check
      _
    $region15: #{tpu_custom_call.1} parent=1 // pred_check_branch
      %22 = sbr.rel (0) target = $region17
    $region16: #{tpu_custom_call.1} parent=1 // pred_region
      _
    $region17: #{tpu_custom_call.1} parent=1 // pred_fallthru
      _
    // Predicated region
    $region18: #{tpu_custom_call.1} parent=1 // pred_check
      _
    $region19: #{tpu_custom_call.1} parent=1 // pred_check_branch
      %24 = sbr.rel (0) target = $region21
    $region20: #{tpu_custom_call.1} parent=1 // pred_region
      _
    $region21: #{tpu_custom_call.1} parent=1 // pred_fallthru
      _
    // Predicated region
    $region22: #{tpu_custom_call.1} parent=1 // pred_check
      _
    $region23: #{tpu_custom_call.1} parent=1 // pred_check_branch
      %26 = sbr.rel (0) target = $region25
    $region24: #{tpu_custom_call.1} parent=1 // pred_region
      _
    $region25: #{tpu_custom_call.1} parent=1 // pred_fallthru
      _
    // Predicated region
    $region26: #{tpu_custom_call.1} parent=1 // pred_check
      _
    $region27: #{tpu_custom_call.1} parent=1 // pred_check_branch
      %28 = sbr.rel (0) target = $region29
    $region28: #{tpu_custom_call.1} parent=1 // pred_region
      _
    $region29: #{tpu_custom_call.1} parent=1 // pred_fallthru
      _
    // Predicated region
    $region30: #{tpu_custom_call.1} parent=1 // pred_check
      _
    $region31: #{tpu_custom_call.1} parent=1 // pred_check_branch
      %30 = sbr.rel (0) target = $region33
    $region32: #{tpu_custom_call.1} parent=1 // pred_region
      _
    $region33: #{tpu_custom_call.1} parent=1 // pred_fallthru
      _
    // Predicated region
    $region34: #{tpu_custom_call.1} parent=1 // pred_check
      _
    $region35: #{tpu_custom_call.1} parent=1 // pred_check_branch
      %32 = sbr.rel (0) target = $region37
    $region36: #{tpu_custom_call.1} parent=1 // pred_region
      _
    $region37: #{tpu_custom_call.1} parent=1 // pred_fallthru
      _
    %v34 = vld [vmem:[%s2] sm:$0xff]
    %v35 = vld [vmem:[%s2 + $0x8] sm:$0xff]
    %v36 = vld [vmem:[%s2 + $0x10] sm:$0xff]
    %v37 = vld [vmem:[%s2 + $0x18] sm:$0xff]
    %v38 = vld [vmem:[%s1] sm:$0x7]
    %40 = vset.pattern.permute.xlu0 0
    %41 = vperm.xlu0 %40, %v34
    %v42 = vpop.permute.xlu0 %41
    %45 = vset.pattern.permute.xlu0 0
    %46 = vperm.xlu0 %45, %v35
    %v47 = vpop.permute.xlu0 %46
    %50 = vset.pattern.permute.xlu0 0
    %51 = vperm.xlu0 %50, %v36
    %v52 = vpop.permute.xlu0 %51
    %55 = vset.pattern.permute.xlu0 0
    %56 = vperm.xlu0 %55, %v37
    %v57 = vpop.permute.xlu0 %56
    %v60 = vperm.slane %v38, 0
    %v61 = vperm.slane %v38, 1
    %v62 = vperm.slane %v38, 2
    %v66 = vmul.f32 %v42, %v60
    %v67 = vmul.f32 %v42, %v61
    %v68 = vmul.f32 %v42, %v62
    %v69 = vmul.f32 %v47, %v60
    %v70 = vmul.f32 %v47, %v61
    %v71 = vmul.f32 %v47, %v62
    %v72 = vmul.f32 %v52, %v60
    %v73 = vmul.f32 %v52, %v61
    %v74 = vmul.f32 %v52, %v62
    %v75 = vmul.f32 %v57, %v60
    %v76 = vmul.f32 %v57, %v61
    %v77 = vmul.f32 %v57, %v62
    %v78 = vld [vmem:[%s3] sm:$0xff]
    %v79 = vld [vmem:[%s3 + $0x8] sm:$0xff]
    %v80 = vld [vmem:[%s3 + $0x10] sm:$0xff]
    %v81 = vld [vmem:[%s3 + $0x18] sm:$0xff]
    %83 = vset.pattern.permute.xlu0 0
    %84 = vperm.xlu0 %83, %v78
    %v85 = vpop.permute.xlu0 %84
    %88 = vset.pattern.permute.xlu0 0
    %89 = vperm.xlu0 %88, %v79
    %v90 = vpop.permute.xlu0 %89
    %93 = vset.pattern.permute.xlu0 0
    %94 = vperm.xlu0 %93, %v80
    %v95 = vpop.permute.xlu0 %94
    %98 = vset.pattern.permute.xlu0 0
    %99 = vperm.xlu0 %98, %v81
    %v100 = vpop.permute.xlu0 %99
    %v102 = vadd.f32 %v66, %v85
    %v103 = vadd.f32 %v67, %v85
    %v104 = vadd.f32 %v68, %v85
    %v105 = vadd.f32 %v69, %v90
    %v106 = vadd.f32 %v70, %v90
    %v107 = vadd.f32 %v71, %v90
    %v108 = vadd.f32 %v72, %v95
    %v109 = vadd.f32 %v73, %v95
    %v110 = vadd.f32 %v74, %v95
    %v111 = vadd.f32 %v75, %v100
    %v112 = vadd.f32 %v76, %v100
    %v113 = vadd.f32 %v77, %v100
    %v114 = vmax.f32 %v102, 0.0
    %v115 = vmax.f32 %v103, 0.0
    %v116 = vmax.f32 %v104, 0.0
    %v117 = vmax.f32 %v105, 0.0
    %v118 = vmax.f32 %v106, 0.0
    %v119 = vmax.f32 %v107, 0.0
    %v120 = vmax.f32 %v108, 0.0
    %v121 = vmax.f32 %v109, 0.0
    %v122 = vmax.f32 %v110, 0.0
    %v123 = vmax.f32 %v111, 0.0
    %v124 = vmax.f32 %v112, 0.0
    %v125 = vmax.f32 %v113, 0.0
    %v126 = vld [vmem:[%s0] sm:$0x1]
    %v127 = vld [vmem:[%s0 + $0x1] sm:$0x1]
    %v128 = vld [vmem:[%s0 + $0x2] sm:$0x1]
    %v129 = vld [vmem:[%s0 + $0x3] sm:$0x1]
    %v130 = vld [vmem:[%s0 + $0x4] sm:$0x1]
    %v131 = vld [vmem:[%s0 + $0x5] sm:$0x1]
    %v132 = vld [vmem:[%s0 + $0x6] sm:$0x1]
    %v133 = vld [vmem:[%s0 + $0x7] sm:$0x1]
    %v134 = vld [vmem:[%s0 + $0x8] sm:$0x1]
    %v135 = vld [vmem:[%s0 + $0x9] sm:$0x1]
    %v136 = vld [vmem:[%s0 + $0xa] sm:$0x1]
    %v137 = vld [vmem:[%s0 + $0xb] sm:$0x1]
    %v138 = vld [vmem:[%s0 + $0xc] sm:$0x1]
    %v139 = vld [vmem:[%s0 + $0xd] sm:$0x1]
    %v140 = vld [vmem:[%s0 + $0xe] sm:$0x1]
    %v141 = vld [vmem:[%s0 + $0xf] sm:$0x1]
    %v142 = vld [vmem:[%s0 + $0x10] sm:$0x1]
    %v143 = vld [vmem:[%s0 + $0x11] sm:$0x1]
    %v144 = vld [vmem:[%s0 + $0x12] sm:$0x1]
    %v145 = vld [vmem:[%s0 + $0x13] sm:$0x1]
    %v146 = vld [vmem:[%s0 + $0x14] sm:$0x1]
    %v147 = vld [vmem:[%s0 + $0x15] sm:$0x1]
    %v148 = vld [vmem:[%s0 + $0x16] sm:$0x1]
    %v149 = vld [vmem:[%s0 + $0x17] sm:$0x1]
    %v150 = vld [vmem:[%s0 + $0x18] sm:$0x1]
    %v151 = vld [vmem:[%s0 + $0x19] sm:$0x1]
    %v152 = vld [vmem:[%s0 + $0x1a] sm:$0x1]
    %v153 = vld [vmem:[%s0 + $0x1b] sm:$0x1]
    %v154 = vld [vmem:[%s0 + $0x1c] sm:$0x1]
    %v155 = vld [vmem:[%s0 + $0x1d] sm:$0x1]
    %v156 = vld [vmem:[%s0 + $0x1e] sm:$0x1]
    %v157 = vld [vmem:[%s0 + $0x1f] sm:$0x1]
    %v158 = vld [vmem:[%s0 + $0x20] sm:$0x1]
    %v159 = vld [vmem:[%s0 + $0x21] sm:$0x1]
    %v160 = vld [vmem:[%s0 + $0x22] sm:$0x1]
    %v161 = vld [vmem:[%s0 + $0x23] sm:$0x1]
    %v162 = vld [vmem:[%s0 + $0x24] sm:$0x1]
    %v163 = vld [vmem:[%s0 + $0x25] sm:$0x1]
    %v164 = vld [vmem:[%s0 + $0x26] sm:$0x1]
    %v165 = vld [vmem:[%s0 + $0x27] sm:$0x1]
    %v166 = vld [vmem:[%s0 + $0x28] sm:$0x1]
    %v167 = vld [vmem:[%s0 + $0x29] sm:$0x1]
    %v168 = vld [vmem:[%s0 + $0x2a] sm:$0x1]
    %v169 = vld [vmem:[%s0 + $0x2b] sm:$0x1]
    %v170 = vld [vmem:[%s0 + $0x2c] sm:$0x1]
    %v171 = vld [vmem:[%s0 + $0x2d] sm:$0x1]
    %v172 = vld [vmem:[%s0 + $0x2e] sm:$0x1]
    %v173 = vld [vmem:[%s0 + $0x2f] sm:$0x1]
    %v174 = vld [vmem:[%s0 + $0x30] sm:$0x1]
    %v175 = vld [vmem:[%s0 + $0x31] sm:$0x1]
    %v176 = vld [vmem:[%s0 + $0x32] sm:$0x1]
    %v177 = vld [vmem:[%s0 + $0x33] sm:$0x1]
    %v178 = vld [vmem:[%s0 + $0x34] sm:$0x1]
    %v179 = vld [vmem:[%s0 + $0x35] sm:$0x1]
    %v180 = vld [vmem:[%s0 + $0x36] sm:$0x1]
    %v181 = vld [vmem:[%s0 + $0x37] sm:$0x1]
    %v182 = vld [vmem:[%s0 + $0x38] sm:$0x1]
    %v183 = vld [vmem:[%s0 + $0x39] sm:$0x1]
    %v184 = vld [vmem:[%s0 + $0x3a] sm:$0x1]
    %v185 = vld [vmem:[%s0 + $0x3b] sm:$0x1]
    %v186 = vld [vmem:[%s0 + $0x3c] sm:$0x1]
    %v187 = vld [vmem:[%s0 + $0x3d] sm:$0x1]
    %v188 = vld [vmem:[%s0 + $0x3e] sm:$0x1]
    %v189 = vld [vmem:[%s0 + $0x3f] sm:$0x1]
    %v190 = vld [vmem:[%s0 + $0x40] sm:$0x1]
    %v191 = vld [vmem:[%s0 + $0x41] sm:$0x1]
    %v192 = vld [vmem:[%s0 + $0x42] sm:$0x1]
    %v193 = vld [vmem:[%s0 + $0x43] sm:$0x1]
    %v194 = vld [vmem:[%s0 + $0x44] sm:$0x1]
    %v195 = vld [vmem:[%s0 + $0x45] sm:$0x1]
    %v196 = vld [vmem:[%s0 + $0x46] sm:$0x1]
    %v197 = vld [vmem:[%s0 + $0x47] sm:$0x1]
    %v198 = vld [vmem:[%s0 + $0x48] sm:$0x1]
    %v199 = vld [vmem:[%s0 + $0x49] sm:$0x1]
    %v200 = vld [vmem:[%s0 + $0x4a] sm:$0x1]
    %v201 = vld [vmem:[%s0 + $0x4b] sm:$0x1]
    %v202 = vld [vmem:[%s0 + $0x4c] sm:$0x1]
    %v203 = vld [vmem:[%s0 + $0x4d] sm:$0x1]
    %v204 = vld [vmem:[%s0 + $0x4e] sm:$0x1]
    %v205 = vld [vmem:[%s0 + $0x4f] sm:$0x1]
    %v206 = vld [vmem:[%s0 + $0x50] sm:$0x1]
    %v207 = vld [vmem:[%s0 + $0x51] sm:$0x1]
    %v208 = vld [vmem:[%s0 + $0x52] sm:$0x1]
    %v209 = vld [vmem:[%s0 + $0x53] sm:$0x1]
    %v210 = vld [vmem:[%s0 + $0x54] sm:$0x1]
    %v211 = vld [vmem:[%s0 + $0x55] sm:$0x1]
    %v212 = vld [vmem:[%s0 + $0x56] sm:$0x1]
    %v213 = vld [vmem:[%s0 + $0x57] sm:$0x1]
    %v214 = vld [vmem:[%s0 + $0x58] sm:$0x1]
    %v215 = vld [vmem:[%s0 + $0x59] sm:$0x1]
    %v216 = vld [vmem:[%s0 + $0x5a] sm:$0x1]
    %v217 = vld [vmem:[%s0 + $0x5b] sm:$0x1]
    %v218 = vld [vmem:[%s0 + $0x5c] sm:$0x1]
    %v219 = vld [vmem:[%s0 + $0x5d] sm:$0x1]
    %v220 = vld [vmem:[%s0 + $0x5e] sm:$0x1]
    %v221 = vld [vmem:[%s0 + $0x5f] sm:$0x1]
    %v222 = vld [vmem:[%s0 + $0x60] sm:$0x1]
    %v223 = vld [vmem:[%s0 + $0x61] sm:$0x1]
    %v224 = vld [vmem:[%s0 + $0x62] sm:$0x1]
    %v225 = vld [vmem:[%s0 + $0x63] sm:$0x1]
    %v226 = vld [vmem:[%s0 + $0x64] sm:$0x1]
    %v227 = vld [vmem:[%s0 + $0x65] sm:$0x1]
    %v228 = vld [vmem:[%s0 + $0x66] sm:$0x1]
    %v229 = vld [vmem:[%s0 + $0x67] sm:$0x1]
    %v230 = vld [vmem:[%s0 + $0x68] sm:$0x1]
    %v231 = vld [vmem:[%s0 + $0x69] sm:$0x1]
    %v232 = vld [vmem:[%s0 + $0x6a] sm:$0x1]
    %v233 = vld [vmem:[%s0 + $0x6b] sm:$0x1]
    %v234 = vld [vmem:[%s0 + $0x6c] sm:$0x1]
    %v235 = vld [vmem:[%s0 + $0x6d] sm:$0x1]
    %v236 = vld [vmem:[%s0 + $0x6e] sm:$0x1]
    %v237 = vld [vmem:[%s0 + $0x6f] sm:$0x1]
    %v238 = vld [vmem:[%s0 + $0x70] sm:$0x1]
    %v239 = vld [vmem:[%s0 + $0x71] sm:$0x1]
    %v240 = vld [vmem:[%s0 + $0x72] sm:$0x1]
    %v241 = vld [vmem:[%s0 + $0x73] sm:$0x1]
    %v242 = vld [vmem:[%s0 + $0x74] sm:$0x1]
    %v243 = vld [vmem:[%s0 + $0x75] sm:$0x1]
    %v244 = vld [vmem:[%s0 + $0x76] sm:$0x1]
    %v245 = vld [vmem:[%s0 + $0x77] sm:$0x1]
    %v246 = vld [vmem:[%s0 + $0x78] sm:$0x1]
    %v247 = vld [vmem:[%s0 + $0x79] sm:$0x1]
    %v248 = vld [vmem:[%s0 + $0x7a] sm:$0x1]
    %v249 = vld [vmem:[%s0 + $0x7b] sm:$0x1]
    %v250 = vld [vmem:[%s0 + $0x7c] sm:$0x1]
    %v251 = vld [vmem:[%s0 + $0x7d] sm:$0x1]
    %v252 = vld [vmem:[%s0 + $0x7e] sm:$0x1]
    %v253 = vld [vmem:[%s0 + $0x7f] sm:$0x1]
    %v254 = vld [vmem:[%s0 + $0x80] sm:$0x1]
    %v255 = vld [vmem:[%s0 + $0x81] sm:$0x1]
    %v256 = vld [vmem:[%s0 + $0x82] sm:$0x1]
    %v257 = vld [vmem:[%s0 + $0x83] sm:$0x1]
    %v258 = vld [vmem:[%s0 + $0x84] sm:$0x1]
    %v259 = vld [vmem:[%s0 + $0x85] sm:$0x1]
    %v260 = vld [vmem:[%s0 + $0x86] sm:$0x1]
    %v261 = vld [vmem:[%s0 + $0x87] sm:$0x1]
    %v262 = vld [vmem:[%s0 + $0x88] sm:$0x1]
    %v263 = vld [vmem:[%s0 + $0x89] sm:$0x1]
    %v264 = vld [vmem:[%s0 + $0x8a] sm:$0x1]
    %v265 = vld [vmem:[%s0 + $0x8b] sm:$0x1]
    %v266 = vld [vmem:[%s0 + $0x8c] sm:$0x1]
    %v267 = vld [vmem:[%s0 + $0x8d] sm:$0x1]
    %v268 = vld [vmem:[%s0 + $0x8e] sm:$0x1]
    %v269 = vld [vmem:[%s0 + $0x8f] sm:$0x1]
    %v270 = vld [vmem:[%s0 + $0x90] sm:$0x1]
    %v271 = vld [vmem:[%s0 + $0x91] sm:$0x1]
    %v272 = vld [vmem:[%s0 + $0x92] sm:$0x1]
    %v273 = vld [vmem:[%s0 + $0x93] sm:$0x1]
    %v274 = vld [vmem:[%s0 + $0x94] sm:$0x1]
    %v275 = vld [vmem:[%s0 + $0x95] sm:$0x1]
    %v276 = vld [vmem:[%s0 + $0x96] sm:$0x1]
    %v277 = vld [vmem:[%s0 + $0x97] sm:$0x1]
    %v278 = vld [vmem:[%s0 + $0x98] sm:$0x1]
    %v279 = vld [vmem:[%s0 + $0x99] sm:$0x1]
    %v280 = vld [vmem:[%s0 + $0x9a] sm:$0x1]
    %v281 = vld [vmem:[%s0 + $0x9b] sm:$0x1]
    %v282 = vld [vmem:[%s0 + $0x9c] sm:$0x1]
    %v283 = vld [vmem:[%s0 + $0x9d] sm:$0x1]
    %v284 = vld [vmem:[%s0 + $0x9e] sm:$0x1]
    %v285 = vld [vmem:[%s0 + $0x9f] sm:$0x1]
    %v286 = vld [vmem:[%s0 + $0xa0] sm:$0x1]
    %v287 = vld [vmem:[%s0 + $0xa1] sm:$0x1]
    %v288 = vld [vmem:[%s0 + $0xa2] sm:$0x1]
    %v289 = vld [vmem:[%s0 + $0xa3] sm:$0x1]
    %v290 = vld [vmem:[%s0 + $0xa4] sm:$0x1]
    %v291 = vld [vmem:[%s0 + $0xa5] sm:$0x1]
    %v292 = vld [vmem:[%s0 + $0xa6] sm:$0x1]
    %v293 = vld [vmem:[%s0 + $0xa7] sm:$0x1]
    %v294 = vld [vmem:[%s0 + $0xa8] sm:$0x1]
    %v295 = vld [vmem:[%s0 + $0xa9] sm:$0x1]
    %v296 = vld [vmem:[%s0 + $0xaa] sm:$0x1]
    %v297 = vld [vmem:[%s0 + $0xab] sm:$0x1]
    %v298 = vld [vmem:[%s0 + $0xac] sm:$0x1]
    %v299 = vld [vmem:[%s0 + $0xad] sm:$0x1]
    %v300 = vld [vmem:[%s0 + $0xae] sm:$0x1]
    %v301 = vld [vmem:[%s0 + $0xaf] sm:$0x1]
    %v302 = vld [vmem:[%s0 + $0xb0] sm:$0x1]
    %v303 = vld [vmem:[%s0 + $0xb1] sm:$0x1]
    %v304 = vld [vmem:[%s0 + $0xb2] sm:$0x1]
    %v305 = vld [vmem:[%s0 + $0xb3] sm:$0x1]
    %v306 = vld [vmem:[%s0 + $0xb4] sm:$0x1]
    %v307 = vld [vmem:[%s0 + $0xb5] sm:$0x1]
    %v308 = vld [vmem:[%s0 + $0xb6] sm:$0x1]
    %v309 = vld [vmem:[%s0 + $0xb7] sm:$0x1]
    %v310 = vld [vmem:[%s0 + $0xb8] sm:$0x1]
    %v311 = vld [vmem:[%s0 + $0xb9] sm:$0x1]
    %v312 = vld [vmem:[%s0 + $0xba] sm:$0x1]
    %v313 = vld [vmem:[%s0 + $0xbb] sm:$0x1]
    %v314 = vld [vmem:[%s0 + $0xbc] sm:$0x1]
    %v315 = vld [vmem:[%s0 + $0xbd] sm:$0x1]
    %v316 = vld [vmem:[%s0 + $0xbe] sm:$0x1]
    %v317 = vld [vmem:[%s0 + $0xbf] sm:$0x1]
    %v318 = vld [vmem:[%s0 + $0xc0] sm:$0x1]
    %v319 = vld [vmem:[%s0 + $0xc1] sm:$0x1]
    %v320 = vld [vmem:[%s0 + $0xc2] sm:$0x1]
    %v321 = vld [vmem:[%s0 + $0xc3] sm:$0x1]
    %v322 = vld [vmem:[%s0 + $0xc4] sm:$0x1]
    %v323 = vld [vmem:[%s0 + $0xc5] sm:$0x1]
    %v324 = vld [vmem:[%s0 + $0xc6] sm:$0x1]
    %v325 = vld [vmem:[%s0 + $0xc7] sm:$0x1]
    %v326 = vld [vmem:[%s0 + $0xc8] sm:$0x1]
    %v327 = vld [vmem:[%s0 + $0xc9] sm:$0x1]
    %v328 = vld [vmem:[%s0 + $0xca] sm:$0x1]
    %v329 = vld [vmem:[%s0 + $0xcb] sm:$0x1]
    %v330 = vld [vmem:[%s0 + $0xcc] sm:$0x1]
    %v331 = vld [vmem:[%s0 + $0xcd] sm:$0x1]
    %v332 = vld [vmem:[%s0 + $0xce] sm:$0x1]
    %v333 = vld [vmem:[%s0 + $0xcf] sm:$0x1]
    %v334 = vld [vmem:[%s0 + $0xd0] sm:$0x1]
    %v335 = vld [vmem:[%s0 + $0xd1] sm:$0x1]
    %v336 = vld [vmem:[%s0 + $0xd2] sm:$0x1]
    %v337 = vld [vmem:[%s0 + $0xd3] sm:$0x1]
    %v338 = vld [vmem:[%s0 + $0xd4] sm:$0x1]
    %v339 = vld [vmem:[%s0 + $0xd5] sm:$0x1]
    %v340 = vld [vmem:[%s0 + $0xd6] sm:$0x1]
    %v341 = vld [vmem:[%s0 + $0xd7] sm:$0x1]
    %v342 = vld [vmem:[%s0 + $0xd8] sm:$0x1]
    %v343 = vld [vmem:[%s0 + $0xd9] sm:$0x1]
    %v344 = vld [vmem:[%s0 + $0xda] sm:$0x1]
    %v345 = vld [vmem:[%s0 + $0xdb] sm:$0x1]
    %v346 = vld [vmem:[%s0 + $0xdc] sm:$0x1]
    %v347 = vld [vmem:[%s0 + $0xdd] sm:$0x1]
    %v348 = vld [vmem:[%s0 + $0xde] sm:$0x1]
    %v349 = vld [vmem:[%s0 + $0xdf] sm:$0x1]
    %v350 = vld [vmem:[%s0 + $0xe0] sm:$0x1]
    %v351 = vld [vmem:[%s0 + $0xe1] sm:$0x1]
    %v352 = vld [vmem:[%s0 + $0xe2] sm:$0x1]
    %v353 = vld [vmem:[%s0 + $0xe3] sm:$0x1]
    %v354 = vld [vmem:[%s0 + $0xe4] sm:$0x1]
    %v355 = vld [vmem:[%s0 + $0xe5] sm:$0x1]
    %v356 = vld [vmem:[%s0 + $0xe6] sm:$0x1]
    %v357 = vld [vmem:[%s0 + $0xe7] sm:$0x1]
    %v358 = vld [vmem:[%s0 + $0xe8] sm:$0x1]
    %v359 = vld [vmem:[%s0 + $0xe9] sm:$0x1]
    %v360 = vld [vmem:[%s0 + $0xea] sm:$0x1]
    %v361 = vld [vmem:[%s0 + $0xeb] sm:$0x1]
    %v362 = vld [vmem:[%s0 + $0xec] sm:$0x1]
    %v363 = vld [vmem:[%s0 + $0xed] sm:$0x1]
    %v364 = vld [vmem:[%s0 + $0xee] sm:$0x1]
    %v365 = vld [vmem:[%s0 + $0xef] sm:$0x1]
    %v366 = vld [vmem:[%s0 + $0xf0] sm:$0x1]
    %v367 = vld [vmem:[%s0 + $0xf1] sm:$0x1]
    %v368 = vld [vmem:[%s0 + $0xf2] sm:$0x1]
    %v369 = vld [vmem:[%s0 + $0xf3] sm:$0x1]
    %v370 = vld [vmem:[%s0 + $0xf4] sm:$0x1]
    %v371 = vld [vmem:[%s0 + $0xf5] sm:$0x1]
    %v372 = vld [vmem:[%s0 + $0xf6] sm:$0x1]
    %v373 = vld [vmem:[%s0 + $0xf7] sm:$0x1]
    %v374 = vld [vmem:[%s0 + $0xf8] sm:$0x1]
    %v375 = vld [vmem:[%s0 + $0xf9] sm:$0x1]
    %v376 = vld [vmem:[%s0 + $0xfa] sm:$0x1]
    %v377 = vld [vmem:[%s0 + $0xfb] sm:$0x1]
    %v378 = vld [vmem:[%s0 + $0xfc] sm:$0x1]
    %v379 = vld [vmem:[%s0 + $0xfd] sm:$0x1]
    %v380 = vld [vmem:[%s0 + $0xfe] sm:$0x1]
    %v381 = vld [vmem:[%s0 + $0xff] sm:$0x1]
    %v382 = vld [vmem:[%s0 + $0x100] sm:$0x1]
    %v383 = vld [vmem:[%s0 + $0x101] sm:$0x1]
    %v384 = vld [vmem:[%s0 + $0x102] sm:$0x1]
    %v385 = vld [vmem:[%s0 + $0x103] sm:$0x1]
    %v386 = vld [vmem:[%s0 + $0x104] sm:$0x1]
    %v387 = vld [vmem:[%s0 + $0x105] sm:$0x1]
    %v388 = vld [vmem:[%s0 + $0x106] sm:$0x1]
    %v389 = vld [vmem:[%s0 + $0x107] sm:$0x1]
    %v390 = vld [vmem:[%s0 + $0x108] sm:$0x1]
    %v391 = vld [vmem:[%s0 + $0x109] sm:$0x1]
    %v392 = vld [vmem:[%s0 + $0x10a] sm:$0x1]
    %v393 = vld [vmem:[%s0 + $0x10b] sm:$0x1]
    %v394 = vld [vmem:[%s0 + $0x10c] sm:$0x1]
    %v395 = vld [vmem:[%s0 + $0x10d] sm:$0x1]
    %v396 = vld [vmem:[%s0 + $0x10e] sm:$0x1]
    %v397 = vld [vmem:[%s0 + $0x10f] sm:$0x1]
    %v398 = vld [vmem:[%s0 + $0x110] sm:$0x1]
    %v399 = vld [vmem:[%s0 + $0x111] sm:$0x1]
    %v400 = vld [vmem:[%s0 + $0x112] sm:$0x1]
    %v401 = vld [vmem:[%s0 + $0x113] sm:$0x1]
    %v402 = vld [vmem:[%s0 + $0x114] sm:$0x1]
    %v403 = vld [vmem:[%s0 + $0x115] sm:$0x1]
    %v404 = vld [vmem:[%s0 + $0x116] sm:$0x1]
    %v405 = vld [vmem:[%s0 + $0x117] sm:$0x1]
    %v406 = vld [vmem:[%s0 + $0x118] sm:$0x1]
    %v407 = vld [vmem:[%s0 + $0x119] sm:$0x1]
    %v408 = vld [vmem:[%s0 + $0x11a] sm:$0x1]
    %v409 = vld [vmem:[%s0 + $0x11b] sm:$0x1]
    %v410 = vld [vmem:[%s0 + $0x11c] sm:$0x1]
    %v411 = vld [vmem:[%s0 + $0x11d] sm:$0x1]
    %v412 = vld [vmem:[%s0 + $0x11e] sm:$0x1]
    %v413 = vld [vmem:[%s0 + $0x11f] sm:$0x1]
    %v414 = vld [vmem:[%s0 + $0x120] sm:$0x1]
    %v415 = vld [vmem:[%s0 + $0x121] sm:$0x1]
    %v416 = vld [vmem:[%s0 + $0x122] sm:$0x1]
    %v417 = vld [vmem:[%s0 + $0x123] sm:$0x1]
    %v418 = vld [vmem:[%s0 + $0x124] sm:$0x1]
    %v419 = vld [vmem:[%s0 + $0x125] sm:$0x1]
    %v420 = vld [vmem:[%s0 + $0x126] sm:$0x1]
    %v421 = vld [vmem:[%s0 + $0x127] sm:$0x1]
    %v422 = vld [vmem:[%s0 + $0x128] sm:$0x1]
    %v423 = vld [vmem:[%s0 + $0x129] sm:$0x1]
    %v424 = vld [vmem:[%s0 + $0x12a] sm:$0x1]
    %v425 = vld [vmem:[%s0 + $0x12b] sm:$0x1]
    %v426 = vpack.c.bf16 %v126, %v126
    %v427 = vpack.c.bf16 %v127, %v127
    %v428 = vpack.c.bf16 %v128, %v128
    %v429 = vpack.c.bf16 %v129, %v129
    %v430 = vpack.c.bf16 %v130, %v130
    %v431 = vpack.c.bf16 %v131, %v131
    %v432 = vpack.c.bf16 %v132, %v132
    %v433 = vpack.c.bf16 %v133, %v133
    %v434 = vpack.c.bf16 %v134, %v134
    %v435 = vpack.c.bf16 %v135, %v135
    %v436 = vpack.c.bf16 %v136, %v136
    %v437 = vpack.c.bf16 %v137, %v137
    %v438 = vpack.c.bf16 %v138, %v138
    %v439 = vpack.c.bf16 %v139, %v139
    %v440 = vpack.c.bf16 %v140, %v140
    %v441 = vpack.c.bf16 %v141, %v141
    %v442 = vpack.c.bf16 %v142, %v142
    %v443 = vpack.c.bf16 %v143, %v143
    %v444 = vpack.c.bf16 %v144, %v144
    %v445 = vpack.c.bf16 %v145, %v145
    %v446 = vpack.c.bf16 %v146, %v146
    %v447 = vpack.c.bf16 %v147, %v147
    %v448 = vpack.c.bf16 %v148, %v148
    %v449 = vpack.c.bf16 %v149, %v149
    %v450 = vpack.c.bf16 %v150, %v150
    %v451 = vpack.c.bf16 %v151, %v151
    %v452 = vpack.c.bf16 %v152, %v152
    %v453 = vpack.c.bf16 %v153, %v153
    %v454 = vpack.c.bf16 %v154, %v154
    %v455 = vpack.c.bf16 %v155, %v155
    %v456 = vpack.c.bf16 %v156, %v156
    %v457 = vpack.c.bf16 %v157, %v157
    %v458 = vpack.c.bf16 %v158, %v158
    %v459 = vpack.c.bf16 %v159, %v159
    %v460 = vpack.c.bf16 %v160, %v160
    %v461 = vpack.c.bf16 %v161, %v161
    %v462 = vpack.c.bf16 %v162, %v162
    %v463 = vpack.c.bf16 %v163, %v163
    %v464 = vpack.c.bf16 %v164, %v164
    %v465 = vpack.c.bf16 %v165, %v165
    %v466 = vpack.c.bf16 %v166, %v166
    %v467 = vpack.c.bf16 %v167, %v167
    %v468 = vpack.c.bf16 %v168, %v168
    %v469 = vpack.c.bf16 %v169, %v169
    %v470 = vpack.c.bf16 %v170, %v170
    %v471 = vpack.c.bf16 %v171, %v171
    %v472 = vpack.c.bf16 %v172, %v172
    %v473 = vpack.c.bf16 %v173, %v173
    %v474 = vpack.c.bf16 %v174, %v174
    %v475 = vpack.c.bf16 %v175, %v175
    %v476 = vpack.c.bf16 %v176, %v176
    %v477 = vpack.c.bf16 %v177, %v177
    %v478 = vpack.c.bf16 %v178, %v178
    %v479 = vpack.c.bf16 %v179, %v179
    %v480 = vpack.c.bf16 %v180, %v180
    %v481 = vpack.c.bf16 %v181, %v181
    %v482 = vpack.c.bf16 %v182, %v182
    %v483 = vpack.c.bf16 %v183, %v183
    %v484 = vpack.c.bf16 %v184, %v184
    %v485 = vpack.c.bf16 %v185, %v185
    %v486 = vpack.c.bf16 %v186, %v186
    %v487 = vpack.c.bf16 %v187, %v187
    %v488 = vpack.c.bf16 %v188, %v188
    %v489 = vpack.c.bf16 %v189, %v189
    %v490 = vpack.c.bf16 %v190, %v190
    %v491 = vpack.c.bf16 %v191, %v191
    %v492 = vpack.c.bf16 %v192, %v192
    %v493 = vpack.c.bf16 %v193, %v193
    %v494 = vpack.c.bf16 %v194, %v194
    %v495 = vpack.c.bf16 %v195, %v195
    %v496 = vpack.c.bf16 %v196, %v196
    %v497 = vpack.c.bf16 %v197, %v197
    %v498 = vpack.c.bf16 %v198, %v198
    %v499 = vpack.c.bf16 %v199, %v199
    %v500 = vpack.c.bf16 %v200, %v200
    %v501 = vpack.c.bf16 %v201, %v201
    %v502 = vpack.c.bf16 %v202, %v202
    %v503 = vpack.c.bf16 %v203, %v203
    %v504 = vpack.c.bf16 %v204, %v204
    %v505 = vpack.c.bf16 %v205, %v205
    %v506 = vpack.c.bf16 %v206, %v206
    %v507 = vpack.c.bf16 %v207, %v207
    %v508 = vpack.c.bf16 %v208, %v208
    %v509 = vpack.c.bf16 %v209, %v209
    %v510 = vpack.c.bf16 %v210, %v210
    %v511 = vpack.c.bf16 %v211, %v211
    %v512 = vpack.c.bf16 %v212, %v212
    %v513 = vpack.c.bf16 %v213, %v213
    %v514 = vpack.c.bf16 %v214, %v214
    %v515 = vpack.c.bf16 %v215, %v215
    %v516 = vpack.c.bf16 %v216, %v216
    %v517 = vpack.c.bf16 %v217, %v217
    %v518 = vpack.c.bf16 %v218, %v218
    %v519 = vpack.c.bf16 %v219, %v219
    %v520 = vpack.c.bf16 %v220, %v220
    %v521 = vpack.c.bf16 %v221, %v221
    %v522 = vpack.c.bf16 %v222, %v222
    %v523 = vpack.c.bf16 %v223, %v223
    %v524 = vpack.c.bf16 %v224, %v224
    %v525 = vpack.c.bf16 %v225, %v225
    %v526 = vpack.c.bf16 %v226, %v226
    %v527 = vpack.c.bf16 %v227, %v227
    %v528 = vpack.c.bf16 %v228, %v228
    %v529 = vpack.c.bf16 %v229, %v229
    %v530 = vpack.c.bf16 %v230, %v230
    %v531 = vpack.c.bf16 %v231, %v231
    %v532 = vpack.c.bf16 %v232, %v232
    %v533 = vpack.c.bf16 %v233, %v233
    %v534 = vpack.c.bf16 %v234, %v234
    %v535 = vpack.c.bf16 %v235, %v235
    %v536 = vpack.c.bf16 %v236, %v236
    %v537 = vpack.c.bf16 %v237, %v237
    %v538 = vpack.c.bf16 %v238, %v238
    %v539 = vpack.c.bf16 %v239, %v239
    %v540 = vpack.c.bf16 %v240, %v240
    %v541 = vpack.c.bf16 %v241, %v241
    %v542 = vpack.c.bf16 %v242, %v242
    %v543 = vpack.c.bf16 %v243, %v243
    %v544 = vpack.c.bf16 %v244, %v244
    %v545 = vpack.c.bf16 %v245, %v245
    %v546 = vpack.c.bf16 %v246, %v246
    %v547 = vpack.c.bf16 %v247, %v247
    %v548 = vpack.c.bf16 %v248, %v248
    %v549 = vpack.c.bf16 %v249, %v249
    %v550 = vpack.c.bf16 %v250, %v250
    %v551 = vpack.c.bf16 %v251, %v251
    %v552 = vpack.c.bf16 %v252, %v252
    %v553 = vpack.c.bf16 %v253, %v253
    %v554 = vpack.c.bf16 %v254, %v254
    %v555 = vpack.c.bf16 %v255, %v255
    %v556 = vpack.c.bf16 %v256, %v256
    %v557 = vpack.c.bf16 %v257, %v257
    %v558 = vpack.c.bf16 %v258, %v258
    %v559 = vpack.c.bf16 %v259, %v259
    %v560 = vpack.c.bf16 %v260, %v260
    %v561 = vpack.c.bf16 %v261, %v261
    %v562 = vpack.c.bf16 %v262, %v262
    %v563 = vpack.c.bf16 %v263, %v263
    %v564 = vpack.c.bf16 %v264, %v264
    %v565 = vpack.c.bf16 %v265, %v265
    %v566 = vpack.c.bf16 %v266, %v266
    %v567 = vpack.c.bf16 %v267, %v267
    %v568 = vpack.c.bf16 %v268, %v268
    %v569 = vpack.c.bf16 %v269, %v269
    %v570 = vpack.c.bf16 %v270, %v270
    %v571 = vpack.c.bf16 %v271, %v271
    %v572 = vpack.c.bf16 %v272, %v272
    %v573 = vpack.c.bf16 %v273, %v273
    %v574 = vpack.c.bf16 %v274, %v274
    %v575 = vpack.c.bf16 %v275, %v275
    %v576 = vpack.c.bf16 %v276, %v276
    %v577 = vpack.c.bf16 %v277, %v277
    %v578 = vpack.c.bf16 %v278, %v278
    %v579 = vpack.c.bf16 %v279, %v279
    %v580 = vpack.c.bf16 %v280, %v280
    %v581 = vpack.c.bf16 %v281, %v281
    %v582 = vpack.c.bf16 %v282, %v282
    %v583 = vpack.c.bf16 %v283, %v283
    %v584 = vpack.c.bf16 %v284, %v284
    %v585 = vpack.c.bf16 %v285, %v285
    %v586 = vpack.c.bf16 %v286, %v286
    %v587 = vpack.c.bf16 %v287, %v287
    %v588 = vpack.c.bf16 %v288, %v288
    %v589 = vpack.c.bf16 %v289, %v289
    %v590 = vpack.c.bf16 %v290, %v290
    %v591 = vpack.c.bf16 %v291, %v291
    %v592 = vpack.c.bf16 %v292, %v292
    %v593 = vpack.c.bf16 %v293, %v293
    %v594 = vpack.c.bf16 %v294, %v294
    %v595 = vpack.c.bf16 %v295, %v295
    %v596 = vpack.c.bf16 %v296, %v296
    %v597 = vpack.c.bf16 %v297, %v297
    %v598 = vpack.c.bf16 %v298, %v298
    %v599 = vpack.c.bf16 %v299, %v299
    %v600 = vpack.c.bf16 %v300, %v300
    %v601 = vpack.c.bf16 %v301, %v301
    %v602 = vpack.c.bf16 %v302, %v302
    %v603 = vpack.c.bf16 %v303, %v303
    %v604 = vpack.c.bf16 %v304, %v304
    %v605 = vpack.c.bf16 %v305, %v305
    %v606 = vpack.c.bf16 %v306, %v306
    %v607 = vpack.c.bf16 %v307, %v307
    %v608 = vpack.c.bf16 %v308, %v308
    %v609 = vpack.c.bf16 %v309, %v309
    %v610 = vpack.c.bf16 %v310, %v310
    %v611 = vpack.c.bf16 %v311, %v311
    %v612 = vpack.c.bf16 %v312, %v312
    %v613 = vpack.c.bf16 %v313, %v313
    %v614 = vpack.c.bf16 %v314, %v314
    %v615 = vpack.c.bf16 %v315, %v315
    %v616 = vpack.c.bf16 %v316, %v316
    %v617 = vpack.c.bf16 %v317, %v317
    %v618 = vpack.c.bf16 %v318, %v318
    %v619 = vpack.c.bf16 %v319, %v319
    %v620 = vpack.c.bf16 %v320, %v320
    %v621 = vpack.c.bf16 %v321, %v321
    %v622 = vpack.c.bf16 %v322, %v322
    %v623 = vpack.c.bf16 %v323, %v323
    %v624 = vpack.c.bf16 %v324, %v324
    %v625 = vpack.c.bf16 %v325, %v325
    %v626 = vpack.c.bf16 %v326, %v326
    %v627 = vpack.c.bf16 %v327, %v327
    %v628 = vpack.c.bf16 %v328, %v328
    %v629 = vpack.c.bf16 %v329, %v329
    %v630 = vpack.c.bf16 %v330, %v330
    %v631 = vpack.c.bf16 %v331, %v331
    %v632 = vpack.c.bf16 %v332, %v332
    %v633 = vpack.c.bf16 %v333, %v333
    %v634 = vpack.c.bf16 %v334, %v334
    %v635 = vpack.c.bf16 %v335, %v335
    %v636 = vpack.c.bf16 %v336, %v336
    %v637 = vpack.c.bf16 %v337, %v337
    %v638 = vpack.c.bf16 %v338, %v338
    %v639 = vpack.c.bf16 %v339, %v339
    %v640 = vpack.c.bf16 %v340, %v340
    %v641 = vpack.c.bf16 %v341, %v341
    %v642 = vpack.c.bf16 %v342, %v342
    %v643 = vpack.c.bf16 %v343, %v343
    %v644 = vpack.c.bf16 %v344, %v344
    %v645 = vpack.c.bf16 %v345, %v345
    %v646 = vpack.c.bf16 %v346, %v346
    %v647 = vpack.c.bf16 %v347, %v347
    %v648 = vpack.c.bf16 %v348, %v348
    %v649 = vpack.c.bf16 %v349, %v349
    %v650 = vpack.c.bf16 %v350, %v350
    %v651 = vpack.c.bf16 %v351, %v351
    %v652 = vpack.c.bf16 %v352, %v352
    %v653 = vpack.c.bf16 %v353, %v353
    %v654 = vpack.c.bf16 %v354, %v354
    %v655 = vpack.c.bf16 %v355, %v355
    %v656 = vpack.c.bf16 %v356, %v356
    %v657 = vpack.c.bf16 %v357, %v357
    %v658 = vpack.c.bf16 %v358, %v358
    %v659 = vpack.c.bf16 %v359, %v359
    %v660 = vpack.c.bf16 %v360, %v360
    %v661 = vpack.c.bf16 %v361, %v361
    %v662 = vpack.c.bf16 %v362, %v362
    %v663 = vpack.c.bf16 %v363, %v363
    %v664 = vpack.c.bf16 %v364, %v364
    %v665 = vpack.c.bf16 %v365, %v365
    %v666 = vpack.c.bf16 %v366, %v366
    %v667 = vpack.c.bf16 %v367, %v367
    %v668 = vpack.c.bf16 %v368, %v368
    %v669 = vpack.c.bf16 %v369, %v369
    %v670 = vpack.c.bf16 %v370, %v370
    %v671 = vpack.c.bf16 %v371, %v371
    %v672 = vpack.c.bf16 %v372, %v372
    %v673 = vpack.c.bf16 %v373, %v373
    %v674 = vpack.c.bf16 %v374, %v374
    %v675 = vpack.c.bf16 %v375, %v375
    %v676 = vpack.c.bf16 %v376, %v376
    %v677 = vpack.c.bf16 %v377, %v377
    %v678 = vpack.c.bf16 %v378, %v378
    %v679 = vpack.c.bf16 %v379, %v379
    %v680 = vpack.c.bf16 %v380, %v380
    %v681 = vpack.c.bf16 %v381, %v381
    %v682 = vpack.c.bf16 %v382, %v382
    %v683 = vpack.c.bf16 %v383, %v383
    %v684 = vpack.c.bf16 %v384, %v384
    %v685 = vpack.c.bf16 %v385, %v385
    %v686 = vpack.c.bf16 %v386, %v386
    %v687 = vpack.c.bf16 %v387, %v387
    %v688 = vpack.c.bf16 %v388, %v388
    %v689 = vpack.c.bf16 %v389, %v389
    %v690 = vpack.c.bf16 %v390, %v390
    %v691 = vpack.c.bf16 %v391, %v391
    %v692 = vpack.c.bf16 %v392, %v392
    %v693 = vpack.c.bf16 %v393, %v393
    %v694 = vpack.c.bf16 %v394, %v394
    %v695 = vpack.c.bf16 %v395, %v395
    %v696 = vpack.c.bf16 %v396, %v396
    %v697 = vpack.c.bf16 %v397, %v397
    %v698 = vpack.c.bf16 %v398, %v398
    %v699 = vpack.c.bf16 %v399, %v399
    %v700 = vpack.c.bf16 %v400, %v400
    %v701 = vpack.c.bf16 %v401, %v401
    %v702 = vpack.c.bf16 %v402, %v402
    %v703 = vpack.c.bf16 %v403, %v403
    %v704 = vpack.c.bf16 %v404, %v404
    %v705 = vpack.c.bf16 %v405, %v405
    %v706 = vpack.c.bf16 %v406, %v406
    %v707 = vpack.c.bf16 %v407, %v407
    %v708 = vpack.c.bf16 %v408, %v408
    %v709 = vpack.c.bf16 %v409, %v409
    %v710 = vpack.c.bf16 %v410, %v410
    %v711 = vpack.c.bf16 %v411, %v411
    %v712 = vpack.c.bf16 %v412, %v412
    %v713 = vpack.c.bf16 %v413, %v413
    %v714 = vpack.c.bf16 %v414, %v414
    %v715 = vpack.c.bf16 %v415, %v415
    %v716 = vpack.c.bf16 %v416, %v416
    %v717 = vpack.c.bf16 %v417, %v417
    %v718 = vpack.c.bf16 %v418, %v418
    %v719 = vpack.c.bf16 %v419, %v419
    %v720 = vpack.c.bf16 %v420, %v420
    %v721 = vpack.c.bf16 %v421, %v421
    %v722 = vpack.c.bf16 %v422, %v422
    %v723 = vpack.c.bf16 %v423, %v423
    %v724 = vpack.c.bf16 %v424, %v424
    %v725 = vpack.c.bf16 %v425, %v425
    %v726 = vld [vmem:[%s4] sm:$0xf]
    %v727 = vld [vmem:[%s4 + $0x4] sm:$0xf]
    %v728 = vld [vmem:[%s4 + $0x8] sm:$0xf]
    %v729 = vld [vmem:[%s4 + $0xc] sm:$0xf]
    %v730 = vld [vmem:[%s4 + $0x10] sm:$0xf]
    %v731 = vld [vmem:[%s4 + $0x14] sm:$0xf]
    %v732 = vld [vmem:[%s4 + $0x18] sm:$0xf]
    %v733 = vld [vmem:[%s4 + $0x1c] sm:$0xf]
    %v734 = vld [vmem:[%s5] sm:$0xf]
    %v735 = vld [vmem:[%s5 + $0x4] sm:$0xf]
    %v736 = vld [vmem:[%s5 + $0x8] sm:$0xf]
    %v737 = vld [vmem:[%s5 + $0xc] sm:$0xf]
    %v738 = vld [vmem:[%s5 + $0x10] sm:$0xf]
    %v739 = vld [vmem:[%s5 + $0x14] sm:$0xf]
    %v740 = vld [vmem:[%s5 + $0x18] sm:$0xf]
    %v741 = vld [vmem:[%s5 + $0x1c] sm:$0xf]
    %v742 = vpack.c.bf16 %v117, %v114
    %v743 = vpack.c.bf16 %v118, %v115
    %v744 = vpack.c.bf16 %v119, %v116
    %v745 = vpack.c.bf16 %v123, %v120
    %v746 = vpack.c.bf16 %v124, %v121
    %v747 = vpack.c.bf16 %v125, %v122
    %v756 = vunpack.c.l.b16 %v734
    %v757 = vunpack.c.l.b16 %v735
    %v758 = vunpack.c.l.b16 %v736
    %v759 = vunpack.c.l.b16 %v737
    %v760 = vunpack.c.l.b16 %v738
    %v761 = vunpack.c.l.b16 %v739
    %v762 = vunpack.c.l.b16 %v740
    %v763 = vunpack.c.l.b16 %v741
    %v764 = vpack.c.b16 %v757, %v756
    %v765 = vpack.c.b16 %v759, %v758
    %v766 = vpack.c.b16 %v761, %v760
    %v767 = vpack.c.b16 %v763, %v762
    %vm768 = vcmask 261120
    %v770 = vsel %vm768, %v764, 0
    %v773 = vsel %vm768, %v765, 0
    %v776 = vsel %vm768, %v766, 0
    %v779 = vsel %vm768, %v767, 0
    %781 = vmatpush.bf16.msra.mxu0 0
    %782 = vmatpush.bf16.msra.mxu0 0
    %783 = vmatpush.bf16.msra.mxu0 0
    %784 = vmatpush.bf16.msra.mxu0 0
    %785 = vmatpush.bf16.msra.mxu0 0
    %786 = vmatpush.bf16.msra.mxu0 0
    %787 = vmatpush.bf16.msra.mxu0 %v745
    %788 = vmatpush.bf16.msra.mxu0 %v742
    %789 = vmatmul.bf16.gmra.mxu0 %v770
    %v790 = vpop.f32.mrf.mxu0
    %v791 = vadd.f32 0.0, %v790
    %v792 = vpop.f32.mrf.mxu0
    %v793 = vadd.f32 0.0, %v792
    %794 = vmatmul.bf16.gmra.mxu0 %v773
    %v795 = vpop.f32.mrf.mxu0
    %v796 = vadd.f32 0.0, %v795
    %v797 = vpop.f32.mrf.mxu0
    %v798 = vadd.f32 0.0, %v797
    %799 = vmatmul.bf16.gmra.mxu0 %v776
    %v800 = vpop.f32.mrf.mxu0
    %v801 = vadd.f32 0.0, %v800
    %v802 = vpop.f32.mrf.mxu0
    %v803 = vadd.f32 0.0, %v802
    %804 = vmatmul.bf16.gmra.mxu0 %v779
    %v805 = vpop.f32.mrf.mxu0
    %v806 = vadd.f32 0.0, %v805
    %v807 = vpop.f32.mrf.mxu0
    %v808 = vadd.f32 0.0, %v807
    %809 = vdwg.mxu0
    %810 = vmatpush.bf16.msra.mxu0 0
    %811 = vmatpush.bf16.msra.mxu0 0
    %812 = vmatpush.bf16.msra.mxu0 0
    %813 = vmatpush.bf16.msra.mxu0 0
    %814 = vmatpush.bf16.msra.mxu0 0
    %815 = vmatpush.bf16.msra.mxu0 0
    %816 = vmatpush.bf16.msra.mxu0 %v746
    %817 = vmatpush.bf16.msra.mxu0 %v743
    %818 = vmatmul.bf16.gmra.mxu0 %v770
    %v819 = vpop.f32.mrf.mxu0
    %v820 = vadd.f32 0.0, %v819
    %v821 = vpop.f32.mrf.mxu0
    %v822 = vadd.f32 0.0, %v821
    %823 = vmatmul.bf16.gmra.mxu0 %v773
    %v824 = vpop.f32.mrf.mxu0
    %v825 = vadd.f32 0.0, %v824
    %v826 = vpop.f32.mrf.mxu0
    %v827 = vadd.f32 0.0, %v826
    %828 = vmatmul.bf16.gmra.mxu0 %v776
    %v829 = vpop.f32.mrf.mxu0
    %v830 = vadd.f32 0.0, %v829
    %v831 = vpop.f32.mrf.mxu0
    %v832 = vadd.f32 0.0, %v831
    %833 = vmatmul.bf16.gmra.mxu0 %v779
    %v834 = vpop.f32.mrf.mxu0
    %v835 = vadd.f32 0.0, %v834
    %v836 = vpop.f32.mrf.mxu0
    %v837 = vadd.f32 0.0, %v836
    %838 = vdwg.mxu0
    %839 = vmatpush.bf16.msra.mxu0 0
    %840 = vmatpush.bf16.msra.mxu0 0
    %841 = vmatpush.bf16.msra.mxu0 0
    %842 = vmatpush.bf16.msra.mxu0 0
    %843 = vmatpush.bf16.msra.mxu0 0
    %844 = vmatpush.bf16.msra.mxu0 0
    %845 = vmatpush.bf16.msra.mxu0 %v747
    %846 = vmatpush.bf16.msra.mxu0 %v744
    %847 = vmatmul.bf16.gmra.mxu0 %v770
    %v848 = vpop.f32.mrf.mxu0
    %v849 = vadd.f32 0.0, %v848
    %v850 = vpop.f32.mrf.mxu0
    %v851 = vadd.f32 0.0, %v850
    %852 = vmatmul.bf16.gmra.mxu0 %v773
    %v853 = vpop.f32.mrf.mxu0
    %v854 = vadd.f32 0.0, %v853
    %v855 = vpop.f32.mrf.mxu0
    %v856 = vadd.f32 0.0, %v855
    %857 = vmatmul.bf16.gmra.mxu0 %v776
    %v858 = vpop.f32.mrf.mxu0
    %v859 = vadd.f32 0.0, %v858
    %v860 = vpop.f32.mrf.mxu0
    %v861 = vadd.f32 0.0, %v860
    %862 = vmatmul.bf16.gmra.mxu0 %v779
    %v863 = vpop.f32.mrf.mxu0
    %v864 = vadd.f32 0.0, %v863
    %v865 = vpop.f32.mrf.mxu0
    %v866 = vadd.f32 0.0, %v865
    %867 = vdwg.mxu0
    %v876 = vunpack.c.l.b16 %v726
    %v877 = vunpack.c.l.b16 %v727
    %v878 = vunpack.c.l.b16 %v728
    %v879 = vunpack.c.l.b16 %v729
    %v880 = vunpack.c.l.b16 %v730
    %v881 = vunpack.c.l.b16 %v731
    %v882 = vunpack.c.l.b16 %v732
    %v883 = vunpack.c.l.b16 %v733
    %v884 = vpack.c.b16 %v877, %v876
    %v885 = vpack.c.b16 %v879, %v878
    %v886 = vpack.c.b16 %v881, %v880
    %v887 = vpack.c.b16 %v883, %v882
    %v1188 = vunpack.c.l.b16 %v426
    %v1189 = vunpack.c.l.b16 %v427
    %v1190 = vunpack.c.l.b16 %v428
    %v1191 = vunpack.c.l.b16 %v429
    %v1192 = vunpack.c.l.b16 %v430
    %v1193 = vunpack.c.l.b16 %v431
    %v1194 = vunpack.c.l.b16 %v432
    %v1195 = vunpack.c.l.b16 %v433
    %v1196 = vunpack.c.l.b16 %v434
    %v1197 = vunpack.c.l.b16 %v435
    %v1198 = vunpack.c.l.b16 %v436
    %v1199 = vunpack.c.l.b16 %v437
    %v1200 = vunpack.c.l.b16 %v438
    %v1201 = vunpack.c.l.b16 %v439
    %v1202 = vunpack.c.l.b16 %v440
    %v1203 = vunpack.c.l.b16 %v441
    %v1204 = vunpack.c.l.b16 %v442
    %v1205 = vunpack.c.l.b16 %v443
    %v1206 = vunpack.c.l.b16 %v444
    %v1207 = vunpack.c.l.b16 %v445
    %v1208 = vunpack.c.l.b16 %v446
    %v1209 = vunpack.c.l.b16 %v447
    %v1210 = vunpack.c.l.b16 %v448
    %v1211 = vunpack.c.l.b16 %v449
    %v1212 = vunpack.c.l.b16 %v450
    %v1213 = vunpack.c.l.b16 %v451
    %v1214 = vunpack.c.l.b16 %v452
    %v1215 = vunpack.c.l.b16 %v453
    %v1216 = vunpack.c.l.b16 %v454
    %v1217 = vunpack.c.l.b16 %v455
    %v1218 = vunpack.c.l.b16 %v456
    %v1219 = vunpack.c.l.b16 %v457
    %v1220 = vunpack.c.l.b16 %v458
    %v1221 = vunpack.c.l.b16 %v459
    %v1222 = vunpack.c.l.b16 %v460
    %v1223 = vunpack.c.l.b16 %v461
    %v1224 = vunpack.c.l.b16 %v462
    %v1225 = vunpack.c.l.b16 %v463
    %v1226 = vunpack.c.l.b16 %v464
    %v1227 = vunpack.c.l.b16 %v465
    %v1228 = vunpack.c.l.b16 %v466
    %v1229 = vunpack.c.l.b16 %v467
    %v1230 = vunpack.c.l.b16 %v468
    %v1231 = vunpack.c.l.b16 %v469
    %v1232 = vunpack.c.l.b16 %v470
    %v1233 = vunpack.c.l.b16 %v471
    %v1234 = vunpack.c.l.b16 %v472
    %v1235 = vunpack.c.l.b16 %v473
    %v1236 = vunpack.c.l.b16 %v474
    %v1237 = vunpack.c.l.b16 %v475
    %v1238 = vunpack.c.l.b16 %v476
    %v1239 = vunpack.c.l.b16 %v477
    %v1240 = vunpack.c.l.b16 %v478
    %v1241 = vunpack.c.l.b16 %v479
    %v1242 = vunpack.c.l.b16 %v480
    %v1243 = vunpack.c.l.b16 %v481
    %v1244 = vunpack.c.l.b16 %v482
    %v1245 = vunpack.c.l.b16 %v483
    %v1246 = vunpack.c.l.b16 %v484
    %v1247 = vunpack.c.l.b16 %v485
    %v1248 = vunpack.c.l.b16 %v486
    %v1249 = vunpack.c.l.b16 %v487
    %v1250 = vunpack.c.l.b16 %v488
    %v1251 = vunpack.c.l.b16 %v489
    %v1252 = vunpack.c.l.b16 %v490
    %v1253 = vunpack.c.l.b16 %v491
    %v1254 = vunpack.c.l.b16 %v492
    %v1255 = vunpack.c.l.b16 %v493
    %v1256 = vunpack.c.l.b16 %v494
    %v1257 = vunpack.c.l.b16 %v495
    %v1258 = vunpack.c.l.b16 %v496
    %v1259 = vunpack.c.l.b16 %v497
    %v1260 = vunpack.c.l.b16 %v498
    %v1261 = vunpack.c.l.b16 %v499
    %v1262 = vunpack.c.l.b16 %v500
    %v1263 = vunpack.c.l.b16 %v501
    %v1264 = vunpack.c.l.b16 %v502
    %v1265 = vunpack.c.l.b16 %v503
    %v1266 = vunpack.c.l.b16 %v504
    %v1267 = vunpack.c.l.b16 %v505
    %v1268 = vunpack.c.l.b16 %v506
    %v1269 = vunpack.c.l.b16 %v507
    %v1270 = vunpack.c.l.b16 %v508
    %v1271 = vunpack.c.l.b16 %v509
    %v1272 = vunpack.c.l.b16 %v510
    %v1273 = vunpack.c.l.b16 %v511
    %v1274 = vunpack.c.l.b16 %v512
    %v1275 = vunpack.c.l.b16 %v513
    %v1276 = vunpack.c.l.b16 %v514
    %v1277 = vunpack.c.l.b16 %v515
    %v1278 = vunpack.c.l.b16 %v516
    %v1279 = vunpack.c.l.b16 %v517
    %v1280 = vunpack.c.l.b16 %v518
    %v1281 = vunpack.c.l.b16 %v519
    %v1282 = vunpack.c.l.b16 %v520
    %v1283 = vunpack.c.l.b16 %v521
    %v1284 = vunpack.c.l.b16 %v522
    %v1285 = vunpack.c.l.b16 %v523
    %v1286 = vunpack.c.l.b16 %v524
    %v1287 = vunpack.c.l.b16 %v525
    %v1288 = vunpack.c.l.b16 %v526
    %v1289 = vunpack.c.l.b16 %v527
    %v1290 = vunpack.c.l.b16 %v528
    %v1291 = vunpack.c.l.b16 %v529
    %v1292 = vunpack.c.l.b16 %v530
    %v1293 = vunpack.c.l.b16 %v531
    %v1294 = vunpack.c.l.b16 %v532
    %v1295 = vunpack.c.l.b16 %v533
    %v1296 = vunpack.c.l.b16 %v534
    %v1297 = vunpack.c.l.b16 %v535
    %v1298 = vunpack.c.l.b16 %v536
    %v1299 = vunpack.c.l.b16 %v537
    %v1300 = vunpack.c.l.b16 %v538
    %v1301 = vunpack.c.l.b16 %v539
    %v1302 = vunpack.c.l.b16 %v540
    %v1303 = vunpack.c.l.b16 %v541
    %v1304 = vunpack.c.l.b16 %v542
    %v1305 = vunpack.c.l.b16 %v543
    %v1306 = vunpack.c.l.b16 %v544
    %v1307 = vunpack.c.l.b16 %v545
    %v1308 = vunpack.c.l.b16 %v546
    %v1309 = vunpack.c.l.b16 %v547
    %v1310 = vunpack.c.l.b16 %v548
    %v1311 = vunpack.c.l.b16 %v549
    %v1312 = vunpack.c.l.b16 %v550
    %v1313 = vunpack.c.l.b16 %v551
    %v1314 = vunpack.c.l.b16 %v552
    %v1315 = vunpack.c.l.b16 %v553
    %v1316 = vunpack.c.l.b16 %v554
    %v1317 = vunpack.c.l.b16 %v555
    %v1318 = vunpack.c.l.b16 %v556
    %v1319 = vunpack.c.l.b16 %v557
    %v1320 = vunpack.c.l.b16 %v558
    %v1321 = vunpack.c.l.b16 %v559
    %v1322 = vunpack.c.l.b16 %v560
    %v1323 = vunpack.c.l.b16 %v561
    %v1324 = vunpack.c.l.b16 %v562
    %v1325 = vunpack.c.l.b16 %v563
    %v1326 = vunpack.c.l.b16 %v564
    %v1327 = vunpack.c.l.b16 %v565
    %v1328 = vunpack.c.l.b16 %v566
    %v1329 = vunpack.c.l.b16 %v567
    %v1330 = vunpack.c.l.b16 %v568
    %v1331 = vunpack.c.l.b16 %v569
    %v1332 = vunpack.c.l.b16 %v570
    %v1333 = vunpack.c.l.b16 %v571
    %v1334 = vunpack.c.l.b16 %v572
    %v1335 = vunpack.c.l.b16 %v573
    %v1336 = vunpack.c.l.b16 %v574
    %v1337 = vunpack.c.l.b16 %v575
    %v1338 = vunpack.c.l.b16 %v576
    %v1339 = vunpack.c.l.b16 %v577
    %v1340 = vunpack.c.l.b16 %v578
    %v1341 = vunpack.c.l.b16 %v579
    %v1342 = vunpack.c.l.b16 %v580
    %v1343 = vunpack.c.l.b16 %v581
    %v1344 = vunpack.c.l.b16 %v582
    %v1345 = vunpack.c.l.b16 %v583
    %v1346 = vunpack.c.l.b16 %v584
    %v1347 = vunpack.c.l.b16 %v585
    %v1348 = vunpack.c.l.b16 %v586
    %v1349 = vunpack.c.l.b16 %v587
    %v1350 = vunpack.c.l.b16 %v588
    %v1351 = vunpack.c.l.b16 %v589
    %v1352 = vunpack.c.l.b16 %v590
    %v1353 = vunpack.c.l.b16 %v591
    %v1354 = vunpack.c.l.b16 %v592
    %v1355 = vunpack.c.l.b16 %v593
    %v1356 = vunpack.c.l.b16 %v594
    %v1357 = vunpack.c.l.b16 %v595
    %v1358 = vunpack.c.l.b16 %v596
    %v1359 = vunpack.c.l.b16 %v597
    %v1360 = vunpack.c.l.b16 %v598
    %v1361 = vunpack.c.l.b16 %v599
    %v1362 = vunpack.c.l.b16 %v600
    %v1363 = vunpack.c.l.b16 %v601
    %v1364 = vunpack.c.l.b16 %v602
    %v1365 = vunpack.c.l.b16 %v603
    %v1366 = vunpack.c.l.b16 %v604
    %v1367 = vunpack.c.l.b16 %v605
    %v1368 = vunpack.c.l.b16 %v606
    %v1369 = vunpack.c.l.b16 %v607
    %v1370 = vunpack.c.l.b16 %v608
    %v1371 = vunpack.c.l.b16 %v609
    %v1372 = vunpack.c.l.b16 %v610
    %v1373 = vunpack.c.l.b16 %v611
    %v1374 = vunpack.c.l.b16 %v612
    %v1375 = vunpack.c.l.b16 %v613
    %v1376 = vunpack.c.l.b16 %v614
    %v1377 = vunpack.c.l.b16 %v615
    %v1378 = vunpack.c.l.b16 %v616
    %v1379 = vunpack.c.l.b16 %v617
    %v1380 = vunpack.c.l.b16 %v618
    %v1381 = vunpack.c.l.b16 %v619
    %v1382 = vunpack.c.l.b16 %v620
    %v1383 = vunpack.c.l.b16 %v621
    %v1384 = vunpack.c.l.b16 %v622
    %v1385 = vunpack.c.l.b16 %v623
    %v1386 = vunpack.c.l.b16 %v624
    %v1387 = vunpack.c.l.b16 %v625
    %v1388 = vunpack.c.l.b16 %v626
    %v1389 = vunpack.c.l.b16 %v627
    %v1390 = vunpack.c.l.b16 %v628
    %v1391 = vunpack.c.l.b16 %v629
    %v1392 = vunpack.c.l.b16 %v630
    %v1393 = vunpack.c.l.b16 %v631
    %v1394 = vunpack.c.l.b16 %v632
    %v1395 = vunpack.c.l.b16 %v633
    %v1396 = vunpack.c.l.b16 %v634
    %v1397 = vunpack.c.l.b16 %v635
    %v1398 = vunpack.c.l.b16 %v636
    %v1399 = vunpack.c.l.b16 %v637
    %v1400 = vunpack.c.l.b16 %v638
    %v1401 = vunpack.c.l.b16 %v639
    %v1402 = vunpack.c.l.b16 %v640
    %v1403 = vunpack.c.l.b16 %v641
    %v1404 = vunpack.c.l.b16 %v642
    %v1405 = vunpack.c.l.b16 %v643
    %v1406 = vunpack.c.l.b16 %v644
    %v1407 = vunpack.c.l.b16 %v645
    %v1408 = vunpack.c.l.b16 %v646
    %v1409 = vunpack.c.l.b16 %v647
    %v1410 = vunpack.c.l.b16 %v648
    %v1411 = vunpack.c.l.b16 %v649
    %v1412 = vunpack.c.l.b16 %v650
    %v1413 = vunpack.c.l.b16 %v651
    %v1414 = vunpack.c.l.b16 %v652
    %v1415 = vunpack.c.l.b16 %v653
    %v1416 = vunpack.c.l.b16 %v654
    %v1417 = vunpack.c.l.b16 %v655
    %v1418 = vunpack.c.l.b16 %v656
    %v1419 = vunpack.c.l.b16 %v657
    %v1420 = vunpack.c.l.b16 %v658
    %v1421 = vunpack.c.l.b16 %v659
    %v1422 = vunpack.c.l.b16 %v660
    %v1423 = vunpack.c.l.b16 %v661
    %v1424 = vunpack.c.l.b16 %v662
    %v1425 = vunpack.c.l.b16 %v663
    %v1426 = vunpack.c.l.b16 %v664
    %v1427 = vunpack.c.l.b16 %v665
    %v1428 = vunpack.c.l.b16 %v666
    %v1429 = vunpack.c.l.b16 %v667
    %v1430 = vunpack.c.l.b16 %v668
    %v1431 = vunpack.c.l.b16 %v669
    %v1432 = vunpack.c.l.b16 %v670
    %v1433 = vunpack.c.l.b16 %v671
    %v1434 = vunpack.c.l.b16 %v672
    %v1435 = vunpack.c.l.b16 %v673
    %v1436 = vunpack.c.l.b16 %v674
    %v1437 = vunpack.c.l.b16 %v675
    %v1438 = vunpack.c.l.b16 %v676
    %v1439 = vunpack.c.l.b16 %v677
    %v1440 = vunpack.c.l.b16 %v678
    %v1441 = vunpack.c.l.b16 %v679
    %v1442 = vunpack.c.l.b16 %v680
    %v1443 = vunpack.c.l.b16 %v681
    %v1444 = vunpack.c.l.b16 %v682
    %v1445 = vunpack.c.l.b16 %v683
    %v1446 = vunpack.c.l.b16 %v684
    %v1447 = vunpack.c.l.b16 %v685
    %v1448 = vunpack.c.l.b16 %v686
    %v1449 = vunpack.c.l.b16 %v687
    %v1450 = vunpack.c.l.b16 %v688
    %v1451 = vunpack.c.l.b16 %v689
    %v1452 = vunpack.c.l.b16 %v690
    %v1453 = vunpack.c.l.b16 %v691
    %v1454 = vunpack.c.l.b16 %v692
    %v1455 = vunpack.c.l.b16 %v693
    %v1456 = vunpack.c.l.b16 %v694
    %v1457 = vunpack.c.l.b16 %v695
    %v1458 = vunpack.c.l.b16 %v696
    %v1459 = vunpack.c.l.b16 %v697
    %v1460 = vunpack.c.l.b16 %v698
    %v1461 = vunpack.c.l.b16 %v699
    %v1462 = vunpack.c.l.b16 %v700
    %v1463 = vunpack.c.l.b16 %v701
    %v1464 = vunpack.c.l.b16 %v702
    %v1465 = vunpack.c.l.b16 %v703
    %v1466 = vunpack.c.l.b16 %v704
    %v1467 = vunpack.c.l.b16 %v705
    %v1468 = vunpack.c.l.b16 %v706
    %v1469 = vunpack.c.l.b16 %v707
    %v1470 = vunpack.c.l.b16 %v708
    %v1471 = vunpack.c.l.b16 %v709
    %v1472 = vunpack.c.l.b16 %v710
    %v1473 = vunpack.c.l.b16 %v711
    %v1474 = vunpack.c.l.b16 %v712
    %v1475 = vunpack.c.l.b16 %v713
    %v1476 = vunpack.c.l.b16 %v714
    %v1477 = vunpack.c.l.b16 %v715
    %v1478 = vunpack.c.l.b16 %v716
    %v1479 = vunpack.c.l.b16 %v717
    %v1480 = vunpack.c.l.b16 %v718
    %v1481 = vunpack.c.l.b16 %v719
    %v1482 = vunpack.c.l.b16 %v720
    %v1483 = vunpack.c.l.b16 %v721
    %v1484 = vunpack.c.l.b16 %v722
    %v1485 = vunpack.c.l.b16 %v723
    %v1486 = vunpack.c.l.b16 %v724
    %v1487 = vunpack.c.l.b16 %v725
    %v1488 = vrot.slane %v1189, 7
    %vm1489 = vcmask 1041409
    %v1490 = vsel %vm1489, %v1488, %v1188
    %v1491 = vrot.slane %v1190, 6
    %vm1492 = vcmask 1042434
    %v1493 = vsel %vm1492, %v1491, %v1490
    %v1494 = vrot.slane %v1191, 5
    %vm1495 = vcmask 1043459
    %v1496 = vsel %vm1495, %v1494, %v1493
    %v1497 = vrot.slane %v1192, 4
    %vm1498 = vcmask 1044484
    %v1499 = vsel %vm1498, %v1497, %v1496
    %v1500 = vrot.slane %v1193, 3
    %vm1501 = vcmask 1045509
    %v1502 = vsel %vm1501, %v1500, %v1499
    %v1503 = vrot.slane %v1194, 2
    %vm1504 = vcmask 1046534
    %v1505 = vsel %vm1504, %v1503, %v1502
    %v1506 = vrot.slane %v1195, 1
    %vm1507 = vcmask 1047559
    %v1508 = vsel %vm1507, %v1506, %v1505
    %v1509 = vrot.slane %v1197, 7
    %v1510 = vsel %vm1489, %v1509, %v1196
    %v1511 = vrot.slane %v1198, 6
    %v1512 = vsel %vm1492, %v1511, %v1510
    %v1513 = vrot.slane %v1199, 5
    %v1514 = vsel %vm1495, %v1513, %v1512
    %v1515 = vrot.slane %v1200, 4
    %v1516 = vsel %vm1498, %v1515, %v1514
    %v1517 = vrot.slane %v1201, 3
    %v1518 = vsel %vm1501, %v1517, %v1516
    %v1519 = vrot.slane %v1202, 2
    %v1520 = vsel %vm1504, %v1519, %v1518
    %v1521 = vrot.slane %v1203, 1
    %v1522 = vsel %vm1507, %v1521, %v1520
    %v1523 = vrot.slane %v1205, 7
    %v1524 = vsel %vm1489, %v1523, %v1204
    %v1525 = vrot.slane %v1206, 6
    %v1526 = vsel %vm1492, %v1525, %v1524
    %v1527 = vrot.slane %v1207, 5
    %v1528 = vsel %vm1495, %v1527, %v1526
    %v1529 = vrot.slane %v1208, 4
    %v1530 = vsel %vm1498, %v1529, %v1528
    %v1531 = vrot.slane %v1209, 3
    %v1532 = vsel %vm1501, %v1531, %v1530
    %v1533 = vrot.slane %v1210, 2
    %v1534 = vsel %vm1504, %v1533, %v1532
    %v1535 = vrot.slane %v1211, 1
    %v1536 = vsel %vm1507, %v1535, %v1534
    %v1537 = vrot.slane %v1213, 7
    %v1538 = vsel %vm1489, %v1537, %v1212
    %v1539 = vrot.slane %v1214, 6
    %v1540 = vsel %vm1492, %v1539, %v1538
    %v1541 = vrot.slane %v1215, 5
    %v1542 = vsel %vm1495, %v1541, %v1540
    %v1543 = vrot.slane %v1216, 4
    %v1544 = vsel %vm1498, %v1543, %v1542
    %v1545 = vrot.slane %v1217, 3
    %v1546 = vsel %vm1501, %v1545, %v1544
    %v1547 = vrot.slane %v1218, 2
    %v1548 = vsel %vm1504, %v1547, %v1546
    %v1549 = vrot.slane %v1219, 1
    %v1550 = vsel %vm1507, %v1549, %v1548
    %v1551 = vrot.slane %v1221, 7
    %v1552 = vsel %vm1489, %v1551, %v1220
    %v1553 = vrot.slane %v1222, 6
    %v1554 = vsel %vm1492, %v1553, %v1552
    %v1555 = vrot.slane %v1223, 5
    %v1556 = vsel %vm1495, %v1555, %v1554
    %v1557 = vrot.slane %v1224, 4
    %v1558 = vsel %vm1498, %v1557, %v1556
    %v1559 = vrot.slane %v1225, 3
    %v1560 = vsel %vm1501, %v1559, %v1558
    %v1561 = vrot.slane %v1226, 2
    %v1562 = vsel %vm1504, %v1561, %v1560
    %v1563 = vrot.slane %v1227, 1
    %v1564 = vsel %vm1507, %v1563, %v1562
    %v1565 = vrot.slane %v1229, 7
    %v1566 = vsel %vm1489, %v1565, %v1228
    %v1567 = vrot.slane %v1230, 6
    %v1568 = vsel %vm1492, %v1567, %v1566
    %v1569 = vrot.slane %v1231, 5
    %v1570 = vsel %vm1495, %v1569, %v1568
    %v1571 = vrot.slane %v1232, 4
    %v1572 = vsel %vm1498, %v1571, %v1570
    %v1573 = vrot.slane %v1233, 3
    %v1574 = vsel %vm1501, %v1573, %v1572
    %v1575 = vrot.slane %v1234, 2
    %v1576 = vsel %vm1504, %v1575, %v1574
    %v1577 = vrot.slane %v1235, 1
    %v1578 = vsel %vm1507, %v1577, %v1576
    %v1579 = vrot.slane %v1237, 7
    %v1580 = vsel %vm1489, %v1579, %v1236
    %v1581 = vrot.slane %v1238, 6
    %v1582 = vsel %vm1492, %v1581, %v1580
    %v1583 = vrot.slane %v1239, 5
    %v1584 = vsel %vm1495, %v1583, %v1582
    %v1585 = vrot.slane %v1240, 4
    %v1586 = vsel %vm1498, %v1585, %v1584
    %v1587 = vrot.slane %v1241, 3
    %v1588 = vsel %vm1501, %v1587, %v1586
    %v1589 = vrot.slane %v1242, 2
    %v1590 = vsel %vm1504, %v1589, %v1588
    %v1591 = vrot.slane %v1243, 1
    %v1592 = vsel %vm1507, %v1591, %v1590
    %v1593 = vrot.slane %v1245, 7
    %v1594 = vsel %vm1489, %v1593, %v1244
    %v1595 = vrot.slane %v1246, 6
    %v1596 = vsel %vm1492, %v1595, %v1594
    %v1597 = vrot.slane %v1247, 5
    %v1598 = vsel %vm1495, %v1597, %v1596
    %v1599 = vrot.slane %v1248, 4
    %v1600 = vsel %vm1498, %v1599, %v1598
    %v1601 = vrot.slane %v1249, 3
    %v1602 = vsel %vm1501, %v1601, %v1600
    %v1603 = vrot.slane %v1250, 2
    %v1604 = vsel %vm1504, %v1603, %v1602
    %v1605 = vrot.slane %v1251, 1
    %v1606 = vsel %vm1507, %v1605, %v1604
    %v1607 = vrot.slane %v1253, 7
    %v1608 = vsel %vm1489, %v1607, %v1252
    %v1609 = vrot.slane %v1254, 6
    %v1610 = vsel %vm1492, %v1609, %v1608
    %v1611 = vrot.slane %v1255, 5
    %v1612 = vsel %vm1495, %v1611, %v1610
    %v1613 = vrot.slane %v1256, 4
    %v1614 = vsel %vm1498, %v1613, %v1612
    %v1615 = vrot.slane %v1257, 3
    %v1616 = vsel %vm1501, %v1615, %v1614
    %v1617 = vrot.slane %v1258, 2
    %v1618 = vsel %vm1504, %v1617, %v1616
    %v1619 = vrot.slane %v1259, 1
    %v1620 = vsel %vm1507, %v1619, %v1618
    %v1621 = vrot.slane %v1261, 7
    %v1622 = vsel %vm1489, %v1621, %v1260
    %v1623 = vrot.slane %v1262, 6
    %v1624 = vsel %vm1492, %v1623, %v1622
    %v1625 = vrot.slane %v1263, 5
    %v1626 = vsel %vm1495, %v1625, %v1624
    %v1627 = vrot.slane %v1264, 4
    %v1628 = vsel %vm1498, %v1627, %v1626
    %v1629 = vrot.slane %v1265, 3
    %v1630 = vsel %vm1501, %v1629, %v1628
    %v1631 = vrot.slane %v1266, 2
    %v1632 = vsel %vm1504, %v1631, %v1630
    %v1633 = vrot.slane %v1267, 1
    %v1634 = vsel %vm1507, %v1633, %v1632
    %v1635 = vrot.slane %v1269, 7
    %v1636 = vsel %vm1489, %v1635, %v1268
    %v1637 = vrot.slane %v1270, 6
    %v1638 = vsel %vm1492, %v1637, %v1636
    %v1639 = vrot.slane %v1271, 5
    %v1640 = vsel %vm1495, %v1639, %v1638
    %v1641 = vrot.slane %v1272, 4
    %v1642 = vsel %vm1498, %v1641, %v1640
    %v1643 = vrot.slane %v1273, 3
    %v1644 = vsel %vm1501, %v1643, %v1642
    %v1645 = vrot.slane %v1274, 2
    %v1646 = vsel %vm1504, %v1645, %v1644
    %v1647 = vrot.slane %v1275, 1
    %v1648 = vsel %vm1507, %v1647, %v1646
    %v1649 = vrot.slane %v1277, 7
    %v1650 = vsel %vm1489, %v1649, %v1276
    %v1651 = vrot.slane %v1278, 6
    %v1652 = vsel %vm1492, %v1651, %v1650
    %v1653 = vrot.slane %v1279, 5
    %v1654 = vsel %vm1495, %v1653, %v1652
    %v1655 = vrot.slane %v1280, 4
    %v1656 = vsel %vm1498, %v1655, %v1654
    %v1657 = vrot.slane %v1281, 3
    %v1658 = vsel %vm1501, %v1657, %v1656
    %v1659 = vrot.slane %v1282, 2
    %v1660 = vsel %vm1504, %v1659, %v1658
    %v1661 = vrot.slane %v1283, 1
    %v1662 = vsel %vm1507, %v1661, %v1660
    %v1663 = vrot.slane %v1285, 7
    %v1664 = vsel %vm1489, %v1663, %v1284
    %v1665 = vrot.slane %v1286, 6
    %v1666 = vsel %vm1492, %v1665, %v1664
    %v1667 = vrot.slane %v1287, 5
    %v1668 = vsel %vm1495, %v1667, %v1666
    %v1669 = vrot.slane %v1288, 4
    %v1670 = vsel %vm1498, %v1669, %v1668
    %v1671 = vrot.slane %v1289, 3
    %v1672 = vsel %vm1501, %v1671, %v1670
    %v1673 = vrot.slane %v1290, 2
    %v1674 = vsel %vm1504, %v1673, %v1672
    %v1675 = vrot.slane %v1291, 1
    %v1676 = vsel %vm1507, %v1675, %v1674
    %v1677 = vrot.slane %v1293, 7
    %v1678 = vsel %vm1489, %v1677, %v1292
    %v1679 = vrot.slane %v1294, 6
    %v1680 = vsel %vm1492, %v1679, %v1678
    %v1681 = vrot.slane %v1295, 5
    %v1682 = vsel %vm1495, %v1681, %v1680
    %v1683 = vrot.slane %v1296, 4
    %v1684 = vsel %vm1498, %v1683, %v1682
    %v1685 = vrot.slane %v1297, 3
    %v1686 = vsel %vm1501, %v1685, %v1684
    %v1687 = vrot.slane %v1298, 2
    %v1688 = vsel %vm1504, %v1687, %v1686
    %v1689 = vrot.slane %v1299, 1
    %v1690 = vsel %vm1507, %v1689, %v1688
    %v1691 = vrot.slane %v1301, 7
    %v1692 = vsel %vm1489, %v1691, %v1300
    %v1693 = vrot.slane %v1302, 6
    %v1694 = vsel %vm1492, %v1693, %v1692
    %v1695 = vrot.slane %v1303, 5
    %v1696 = vsel %vm1495, %v1695, %v1694
    %v1697 = vrot.slane %v1304, 4
    %v1698 = vsel %vm1498, %v1697, %v1696
    %v1699 = vrot.slane %v1305, 3
    %v1700 = vsel %vm1501, %v1699, %v1698
    %v1701 = vrot.slane %v1306, 2
    %v1702 = vsel %vm1504, %v1701, %v1700
    %v1703 = vrot.slane %v1307, 1
    %v1704 = vsel %vm1507, %v1703, %v1702
    %v1705 = vrot.slane %v1309, 7
    %v1706 = vsel %vm1489, %v1705, %v1308
    %v1707 = vrot.slane %v1310, 6
    %v1708 = vsel %vm1492, %v1707, %v1706
    %v1709 = vrot.slane %v1311, 5
    %v1710 = vsel %vm1495, %v1709, %v1708
    %v1711 = vrot.slane %v1312, 4
    %v1712 = vsel %vm1498, %v1711, %v1710
    %v1713 = vrot.slane %v1313, 3
    %v1714 = vsel %vm1501, %v1713, %v1712
    %v1715 = vrot.slane %v1314, 2
    %v1716 = vsel %vm1504, %v1715, %v1714
    %v1717 = vrot.slane %v1315, 1
    %v1718 = vsel %vm1507, %v1717, %v1716
    %v1719 = vrot.slane %v1317, 7
    %v1720 = vsel %vm1489, %v1719, %v1316
    %v1721 = vrot.slane %v1318, 6
    %v1722 = vsel %vm1492, %v1721, %v1720
    %v1723 = vrot.slane %v1319, 5
    %v1724 = vsel %vm1495, %v1723, %v1722
    %v1725 = vrot.slane %v1320, 4
    %v1726 = vsel %vm1498, %v1725, %v1724
    %v1727 = vrot.slane %v1321, 3
    %v1728 = vsel %vm1501, %v1727, %v1726
    %v1729 = vrot.slane %v1322, 2
    %v1730 = vsel %vm1504, %v1729, %v1728
    %v1731 = vrot.slane %v1323, 1
    %v1732 = vsel %vm1507, %v1731, %v1730
    %v1733 = vrot.slane %v1325, 7
    %v1734 = vsel %vm1489, %v1733, %v1324
    %v1735 = vrot.slane %v1326, 6
    %v1736 = vsel %vm1492, %v1735, %v1734
    %v1737 = vrot.slane %v1327, 5
    %v1738 = vsel %vm1495, %v1737, %v1736
    %v1739 = vrot.slane %v1328, 4
    %v1740 = vsel %vm1498, %v1739, %v1738
    %v1741 = vrot.slane %v1329, 3
    %v1742 = vsel %vm1501, %v1741, %v1740
    %v1743 = vrot.slane %v1330, 2
    %v1744 = vsel %vm1504, %v1743, %v1742
    %v1745 = vrot.slane %v1331, 1
    %v1746 = vsel %vm1507, %v1745, %v1744
    %v1747 = vrot.slane %v1333, 7
    %v1748 = vsel %vm1489, %v1747, %v1332
    %v1749 = vrot.slane %v1334, 6
    %v1750 = vsel %vm1492, %v1749, %v1748
    %v1751 = vrot.slane %v1335, 5
    %v1752 = vsel %vm1495, %v1751, %v1750
    %v1753 = vrot.slane %v1336, 4
    %v1754 = vsel %vm1498, %v1753, %v1752
    %v1755 = vrot.slane %v1337, 3
    %v1756 = vsel %vm1501, %v1755, %v1754
    %v1757 = vrot.slane %v1338, 2
    %v1758 = vsel %vm1504, %v1757, %v1756
    %v1759 = vrot.slane %v1339, 1
    %v1760 = vsel %vm1507, %v1759, %v1758
    %v1761 = vrot.slane %v1341, 7
    %v1762 = vsel %vm1489, %v1761, %v1340
    %v1763 = vrot.slane %v1342, 6
    %v1764 = vsel %vm1492, %v1763, %v1762
    %v1765 = vrot.slane %v1343, 5
    %v1766 = vsel %vm1495, %v1765, %v1764
    %v1767 = vrot.slane %v1344, 4
    %v1768 = vsel %vm1498, %v1767, %v1766
    %v1769 = vrot.slane %v1345, 3
    %v1770 = vsel %vm1501, %v1769, %v1768
    %v1771 = vrot.slane %v1346, 2
    %v1772 = vsel %vm1504, %v1771, %v1770
    %v1773 = vrot.slane %v1347, 1
    %v1774 = vsel %vm1507, %v1773, %v1772
    %v1775 = vrot.slane %v1349, 7
    %v1776 = vsel %vm1489, %v1775, %v1348
    %v1777 = vrot.slane %v1350, 6
    %v1778 = vsel %vm1492, %v1777, %v1776
    %v1779 = vrot.slane %v1351, 5
    %v1780 = vsel %vm1495, %v1779, %v1778
    %v1781 = vrot.slane %v1352, 4
    %v1782 = vsel %vm1498, %v1781, %v1780
    %v1783 = vrot.slane %v1353, 3
    %v1784 = vsel %vm1501, %v1783, %v1782
    %v1785 = vrot.slane %v1354, 2
    %v1786 = vsel %vm1504, %v1785, %v1784
    %v1787 = vrot.slane %v1355, 1
    %v1788 = vsel %vm1507, %v1787, %v1786
    %v1789 = vrot.slane %v1357, 7
    %v1790 = vsel %vm1489, %v1789, %v1356
    %v1791 = vrot.slane %v1358, 6
    %v1792 = vsel %vm1492, %v1791, %v1790
    %v1793 = vrot.slane %v1359, 5
    %v1794 = vsel %vm1495, %v1793, %v1792
    %v1795 = vrot.slane %v1360, 4
    %v1796 = vsel %vm1498, %v1795, %v1794
    %v1797 = vrot.slane %v1361, 3
    %v1798 = vsel %vm1501, %v1797, %v1796
    %v1799 = vrot.slane %v1362, 2
    %v1800 = vsel %vm1504, %v1799, %v1798
    %v1801 = vrot.slane %v1363, 1
    %v1802 = vsel %vm1507, %v1801, %v1800
    %v1803 = vrot.slane %v1365, 7
    %v1804 = vsel %vm1489, %v1803, %v1364
    %v1805 = vrot.slane %v1366, 6
    %v1806 = vsel %vm1492, %v1805, %v1804
    %v1807 = vrot.slane %v1367, 5
    %v1808 = vsel %vm1495, %v1807, %v1806
    %v1809 = vrot.slane %v1368, 4
    %v1810 = vsel %vm1498, %v1809, %v1808
    %v1811 = vrot.slane %v1369, 3
    %v1812 = vsel %vm1501, %v1811, %v1810
    %v1813 = vrot.slane %v1370, 2
    %v1814 = vsel %vm1504, %v1813, %v1812
    %v1815 = vrot.slane %v1371, 1
    %v1816 = vsel %vm1507, %v1815, %v1814
    %v1817 = vrot.slane %v1373, 7
    %v1818 = vsel %vm1489, %v1817, %v1372
    %v1819 = vrot.slane %v1374, 6
    %v1820 = vsel %vm1492, %v1819, %v1818
    %v1821 = vrot.slane %v1375, 5
    %v1822 = vsel %vm1495, %v1821, %v1820
    %v1823 = vrot.slane %v1376, 4
    %v1824 = vsel %vm1498, %v1823, %v1822
    %v1825 = vrot.slane %v1377, 3
    %v1826 = vsel %vm1501, %v1825, %v1824
    %v1827 = vrot.slane %v1378, 2
    %v1828 = vsel %vm1504, %v1827, %v1826
    %v1829 = vrot.slane %v1379, 1
    %v1830 = vsel %vm1507, %v1829, %v1828
    %v1831 = vrot.slane %v1381, 7
    %v1832 = vsel %vm1489, %v1831, %v1380
    %v1833 = vrot.slane %v1382, 6
    %v1834 = vsel %vm1492, %v1833, %v1832
    %v1835 = vrot.slane %v1383, 5
    %v1836 = vsel %vm1495, %v1835, %v1834
    %v1837 = vrot.slane %v1384, 4
    %v1838 = vsel %vm1498, %v1837, %v1836
    %v1839 = vrot.slane %v1385, 3
    %v1840 = vsel %vm1501, %v1839, %v1838
    %v1841 = vrot.slane %v1386, 2
    %v1842 = vsel %vm1504, %v1841, %v1840
    %v1843 = vrot.slane %v1387, 1
    %v1844 = vsel %vm1507, %v1843, %v1842
    %v1845 = vrot.slane %v1389, 7
    %v1846 = vsel %vm1489, %v1845, %v1388
    %v1847 = vrot.slane %v1390, 6
    %v1848 = vsel %vm1492, %v1847, %v1846
    %v1849 = vrot.slane %v1391, 5
    %v1850 = vsel %vm1495, %v1849, %v1848
    %v1851 = vrot.slane %v1392, 4
    %v1852 = vsel %vm1498, %v1851, %v1850
    %v1853 = vrot.slane %v1393, 3
    %v1854 = vsel %vm1501, %v1853, %v1852
    %v1855 = vrot.slane %v1394, 2
    %v1856 = vsel %vm1504, %v1855, %v1854
    %v1857 = vrot.slane %v1395, 1
    %v1858 = vsel %vm1507, %v1857, %v1856
    %v1859 = vrot.slane %v1397, 7
    %v1860 = vsel %vm1489, %v1859, %v1396
    %v1861 = vrot.slane %v1398, 6
    %v1862 = vsel %vm1492, %v1861, %v1860
    %v1863 = vrot.slane %v1399, 5
    %v1864 = vsel %vm1495, %v1863, %v1862
    %v1865 = vrot.slane %v1400, 4
    %v1866 = vsel %vm1498, %v1865, %v1864
    %v1867 = vrot.slane %v1401, 3
    %v1868 = vsel %vm1501, %v1867, %v1866
    %v1869 = vrot.slane %v1402, 2
    %v1870 = vsel %vm1504, %v1869, %v1868
    %v1871 = vrot.slane %v1403, 1
    %v1872 = vsel %vm1507, %v1871, %v1870
    %v1873 = vrot.slane %v1405, 7
    %v1874 = vsel %vm1489, %v1873, %v1404
    %v1875 = vrot.slane %v1406, 6
    %v1876 = vsel %vm1492, %v1875, %v1874
    %v1877 = vrot.slane %v1407, 5
    %v1878 = vsel %vm1495, %v1877, %v1876
    %v1879 = vrot.slane %v1408, 4
    %v1880 = vsel %vm1498, %v1879, %v1878
    %v1881 = vrot.slane %v1409, 3
    %v1882 = vsel %vm1501, %v1881, %v1880
    %v1883 = vrot.slane %v1410, 2
    %v1884 = vsel %vm1504, %v1883, %v1882
    %v1885 = vrot.slane %v1411, 1
    %v1886 = vsel %vm1507, %v1885, %v1884
    %v1887 = vrot.slane %v1413, 7
    %v1888 = vsel %vm1489, %v1887, %v1412
    %v1889 = vrot.slane %v1414, 6
    %v1890 = vsel %vm1492, %v1889, %v1888
    %v1891 = vrot.slane %v1415, 5
    %v1892 = vsel %vm1495, %v1891, %v1890
    %v1893 = vrot.slane %v1416, 4
    %v1894 = vsel %vm1498, %v1893, %v1892
    %v1895 = vrot.slane %v1417, 3
    %v1896 = vsel %vm1501, %v1895, %v1894
    %v1897 = vrot.slane %v1418, 2
    %v1898 = vsel %vm1504, %v1897, %v1896
    %v1899 = vrot.slane %v1419, 1
    %v1900 = vsel %vm1507, %v1899, %v1898
    %v1901 = vrot.slane %v1421, 7
    %v1902 = vsel %vm1489, %v1901, %v1420
    %v1903 = vrot.slane %v1422, 6
    %v1904 = vsel %vm1492, %v1903, %v1902
    %v1905 = vrot.slane %v1423, 5
    %v1906 = vsel %vm1495, %v1905, %v1904
    %v1907 = vrot.slane %v1424, 4
    %v1908 = vsel %vm1498, %v1907, %v1906
    %v1909 = vrot.slane %v1425, 3
    %v1910 = vsel %vm1501, %v1909, %v1908
    %v1911 = vrot.slane %v1426, 2
    %v1912 = vsel %vm1504, %v1911, %v1910
    %v1913 = vrot.slane %v1427, 1
    %v1914 = vsel %vm1507, %v1913, %v1912
    %v1915 = vrot.slane %v1429, 7
    %v1916 = vsel %vm1489, %v1915, %v1428
    %v1917 = vrot.slane %v1430, 6
    %v1918 = vsel %vm1492, %v1917, %v1916
    %v1919 = vrot.slane %v1431, 5
    %v1920 = vsel %vm1495, %v1919, %v1918
    %v1921 = vrot.slane %v1432, 4
    %v1922 = vsel %vm1498, %v1921, %v1920
    %v1923 = vrot.slane %v1433, 3
    %v1924 = vsel %vm1501, %v1923, %v1922
    %v1925 = vrot.slane %v1434, 2
    %v1926 = vsel %vm1504, %v1925, %v1924
    %v1927 = vrot.slane %v1435, 1
    %v1928 = vsel %vm1507, %v1927, %v1926
    %v1929 = vrot.slane %v1437, 7
    %v1930 = vsel %vm1489, %v1929, %v1436
    %v1931 = vrot.slane %v1438, 6
    %v1932 = vsel %vm1492, %v1931, %v1930
    %v1933 = vrot.slane %v1439, 5
    %v1934 = vsel %vm1495, %v1933, %v1932
    %v1935 = vrot.slane %v1440, 4
    %v1936 = vsel %vm1498, %v1935, %v1934
    %v1937 = vrot.slane %v1441, 3
    %v1938 = vsel %vm1501, %v1937, %v1936
    %v1939 = vrot.slane %v1442, 2
    %v1940 = vsel %vm1504, %v1939, %v1938
    %v1941 = vrot.slane %v1443, 1
    %v1942 = vsel %vm1507, %v1941, %v1940
    %v1943 = vrot.slane %v1445, 7
    %v1944 = vsel %vm1489, %v1943, %v1444
    %v1945 = vrot.slane %v1446, 6
    %v1946 = vsel %vm1492, %v1945, %v1944
    %v1947 = vrot.slane %v1447, 5
    %v1948 = vsel %vm1495, %v1947, %v1946
    %v1949 = vrot.slane %v1448, 4
    %v1950 = vsel %vm1498, %v1949, %v1948
    %v1951 = vrot.slane %v1449, 3
    %v1952 = vsel %vm1501, %v1951, %v1950
    %v1953 = vrot.slane %v1450, 2
    %v1954 = vsel %vm1504, %v1953, %v1952
    %v1955 = vrot.slane %v1451, 1
    %v1956 = vsel %vm1507, %v1955, %v1954
    %v1957 = vrot.slane %v1453, 7
    %v1958 = vsel %vm1489, %v1957, %v1452
    %v1959 = vrot.slane %v1454, 6
    %v1960 = vsel %vm1492, %v1959, %v1958
    %v1961 = vrot.slane %v1455, 5
    %v1962 = vsel %vm1495, %v1961, %v1960
    %v1963 = vrot.slane %v1456, 4
    %v1964 = vsel %vm1498, %v1963, %v1962
    %v1965 = vrot.slane %v1457, 3
    %v1966 = vsel %vm1501, %v1965, %v1964
    %v1967 = vrot.slane %v1458, 2
    %v1968 = vsel %vm1504, %v1967, %v1966
    %v1969 = vrot.slane %v1459, 1
    %v1970 = vsel %vm1507, %v1969, %v1968
    %v1971 = vrot.slane %v1461, 7
    %v1972 = vsel %vm1489, %v1971, %v1460
    %v1973 = vrot.slane %v1462, 6
    %v1974 = vsel %vm1492, %v1973, %v1972
    %v1975 = vrot.slane %v1463, 5
    %v1976 = vsel %vm1495, %v1975, %v1974
    %v1977 = vrot.slane %v1464, 4
    %v1978 = vsel %vm1498, %v1977, %v1976
    %v1979 = vrot.slane %v1465, 3
    %v1980 = vsel %vm1501, %v1979, %v1978
    %v1981 = vrot.slane %v1466, 2
    %v1982 = vsel %vm1504, %v1981, %v1980
    %v1983 = vrot.slane %v1467, 1
    %v1984 = vsel %vm1507, %v1983, %v1982
    %v1985 = vrot.slane %v1469, 7
    %v1986 = vsel %vm1489, %v1985, %v1468
    %v1987 = vrot.slane %v1470, 6
    %v1988 = vsel %vm1492, %v1987, %v1986
    %v1989 = vrot.slane %v1471, 5
    %v1990 = vsel %vm1495, %v1989, %v1988
    %v1991 = vrot.slane %v1472, 4
    %v1992 = vsel %vm1498, %v1991, %v1990
    %v1993 = vrot.slane %v1473, 3
    %v1994 = vsel %vm1501, %v1993, %v1992
    %v1995 = vrot.slane %v1474, 2
    %v1996 = vsel %vm1504, %v1995, %v1994
    %v1997 = vrot.slane %v1475, 1
    %v1998 = vsel %vm1507, %v1997, %v1996
    %v1999 = vrot.slane %v1477, 7
    %v2000 = vsel %vm1489, %v1999, %v1476
    %v2001 = vrot.slane %v1478, 6
    %v2002 = vsel %vm1492, %v2001, %v2000
    %v2003 = vrot.slane %v1479, 5
    %v2004 = vsel %vm1495, %v2003, %v2002
    %v2005 = vrot.slane %v1480, 4
    %v2006 = vsel %vm1498, %v2005, %v2004
    %v2007 = vrot.slane %v1481, 3
    %v2008 = vsel %vm1501, %v2007, %v2006
    %v2009 = vrot.slane %v1482, 2
    %v2010 = vsel %vm1504, %v2009, %v2008
    %v2011 = vrot.slane %v1483, 1
    %v2012 = vsel %vm1507, %v2011, %v2010
    %v2013 = vrot.slane %v1485, 7
    %v2014 = vsel %vm1489, %v2013, %v1484
    %v2015 = vrot.slane %v1486, 6
    %v2016 = vsel %vm1492, %v2015, %v2014
    %v2017 = vrot.slane %v1487, 5
    %v2018 = vsel %vm1495, %v2017, %v2016
    %v2019 = vpack.c.b16 %v1522, %v1508
    %v2020 = vpack.c.b16 %v1550, %v1536
    %v2021 = vpack.c.b16 %v1578, %v1564
    %v2022 = vpack.c.b16 %v1606, %v1592
    %v2023 = vpack.c.b16 %v1634, %v1620
    %v2024 = vpack.c.b16 %v1662, %v1648
    %v2025 = vpack.c.b16 %v1690, %v1676
    %v2026 = vpack.c.b16 %v1718, %v1704
    %v2027 = vpack.c.b16 %v1746, %v1732
    %v2028 = vpack.c.b16 %v1774, %v1760
    %v2029 = vpack.c.b16 %v1802, %v1788
    %v2030 = vpack.c.b16 %v1830, %v1816
    %v2031 = vpack.c.b16 %v1858, %v1844
    %v2032 = vpack.c.b16 %v1886, %v1872
    %v2033 = vpack.c.b16 %v1914, %v1900
    %v2034 = vpack.c.b16 %v1942, %v1928
    %v2035 = vpack.c.b16 %v1970, %v1956
    %v2036 = vpack.c.b16 %v1998, %v1984
    %v2037 = vpack.c.b16 %v2018, %v2012
    %v2039 = vsel %vm768, %v884, 0
    %v2042 = vsel %vm768, %v885, 0
    %v2045 = vsel %vm768, %v886, 0
    %v2048 = vsel %vm768, %v887, 0
    %v2051 = vsel %vm768, %v2019, 0
    %v2054 = vsel %vm768, %v2020, 0
    %v2057 = vsel %vm768, %v2021, 0
    %v2060 = vsel %vm768, %v2022, 0
    %v2063 = vsel %vm768, %v2023, 0
    %v2066 = vsel %vm768, %v2024, 0
    %v2069 = vsel %vm768, %v2025, 0
    %v2072 = vsel %vm768, %v2026, 0
    %v2075 = vsel %vm768, %v2027, 0
    %v2078 = vsel %vm768, %v2028, 0
    %v2081 = vsel %vm768, %v2029, 0
    %v2084 = vsel %vm768, %v2030, 0
    %v2087 = vsel %vm768, %v2031, 0
    %v2090 = vsel %vm768, %v2032, 0
    %v2093 = vsel %vm768, %v2033, 0
    %v2096 = vsel %vm768, %v2034, 0
    %v2099 = vsel %vm768, %v2035, 0
    %v2102 = vsel %vm768, %v2036, 0
    %v2105 = vsel %vm768, %v2037, 0
    %2107 = vmatpush.bf16.xpose.msra.mxu0 %v2072
    %2108 = vmatpush.bf16.xpose.msra.mxu0 %v2069
    %2109 = vmatpush.bf16.xpose.msra.mxu0 %v2066
    %2110 = vmatpush.bf16.xpose.msra.mxu0 %v2063
    %2111 = vmatpush.bf16.xpose.msra.mxu0 %v2060
    %2112 = vmatpush.bf16.xpose.msra.mxu0 %v2057
    %2113 = vmatpush.bf16.xpose.msra.mxu0 %v2054
    %2114 = vmatpush.bf16.xpose.msra.mxu0 %v2051
    %2115 = vmatmul.bf16.gmra.mxu0 %v2039
    %v2116 = vpop.f32.mrf.mxu0
    %v2117 = vadd.f32 %v791, %v2116
    %v2118 = vpop.f32.mrf.mxu0
    %v2119 = vadd.f32 %v793, %v2118
    %2120 = vmatmul.bf16.gmra.mxu0 %v2042
    %v2121 = vpop.f32.mrf.mxu0
    %v2122 = vadd.f32 %v796, %v2121
    %v2123 = vpop.f32.mrf.mxu0
    %v2124 = vadd.f32 %v798, %v2123
    %2125 = vmatmul.bf16.gmra.mxu0 %v2045
    %v2126 = vpop.f32.mrf.mxu0
    %v2127 = vadd.f32 %v801, %v2126
    %v2128 = vpop.f32.mrf.mxu0
    %v2129 = vadd.f32 %v803, %v2128
    %2130 = vmatmul.bf16.gmra.mxu0 %v2048
    %v2131 = vpop.f32.mrf.mxu0
    %v2132 = vadd.f32 %v806, %v2131
    %v2133 = vpop.f32.mrf.mxu0
    %v2134 = vadd.f32 %v808, %v2133
    %2135 = vdwg.mxu0
    %2136 = vmatpush.bf16.xpose.msra.mxu0 %v2096
    %2137 = vmatpush.bf16.xpose.msra.mxu0 %v2093
    %2138 = vmatpush.bf16.xpose.msra.mxu0 %v2090
    %2139 = vmatpush.bf16.xpose.msra.mxu0 %v2087
    %2140 = vmatpush.bf16.xpose.msra.mxu0 %v2084
    %2141 = vmatpush.bf16.xpose.msra.mxu0 %v2081
    %2142 = vmatpush.bf16.xpose.msra.mxu0 %v2078
    %2143 = vmatpush.bf16.xpose.msra.mxu0 %v2075
    %2144 = vmatmul.bf16.gmra.mxu0 %v2039
    %v2145 = vpop.f32.mrf.mxu0
    %v2146 = vadd.f32 %v820, %v2145
    %v2147 = vpop.f32.mrf.mxu0
    %v2148 = vadd.f32 %v822, %v2147
    %2149 = vmatmul.bf16.gmra.mxu0 %v2042
    %v2150 = vpop.f32.mrf.mxu0
    %v2151 = vadd.f32 %v825, %v2150
    %v2152 = vpop.f32.mrf.mxu0
    %v2153 = vadd.f32 %v827, %v2152
    %2154 = vmatmul.bf16.gmra.mxu0 %v2045
    %v2155 = vpop.f32.mrf.mxu0
    %v2156 = vadd.f32 %v830, %v2155
    %v2157 = vpop.f32.mrf.mxu0
    %v2158 = vadd.f32 %v832, %v2157
    %2159 = vmatmul.bf16.gmra.mxu0 %v2048
    %v2160 = vpop.f32.mrf.mxu0
    %v2161 = vadd.f32 %v835, %v2160
    %v2162 = vpop.f32.mrf.mxu0
    %v2163 = vadd.f32 %v837, %v2162
    %2164 = vdwg.mxu0
    %2165 = vmatpush.bf16.xpose.msra.mxu0 0
    %2166 = vmatpush.bf16.xpose.msra.mxu0 0
    %2167 = vmatpush.bf16.xpose.msra.mxu0 0
    %2168 = vmatpush.bf16.xpose.msra.mxu0 0
    %2169 = vmatpush.bf16.xpose.msra.mxu0 0
    %2170 = vmatpush.bf16.xpose.msra.mxu0 %v2105
    %2171 = vmatpush.bf16.xpose.msra.mxu0 %v2102
    %2172 = vmatpush.bf16.xpose.msra.mxu0 %v2099
    %2173 = vmatmul.bf16.gmra.mxu0 %v2039
    %v2174 = vpop.f32.mrf.mxu0
    %v2175 = vadd.f32 %v849, %v2174
    %v2176 = vpop.f32.mrf.mxu0
    %v2177 = vadd.f32 %v851, %v2176
    %2178 = vmatmul.bf16.gmra.mxu0 %v2042
    %v2179 = vpop.f32.mrf.mxu0
    %v2180 = vadd.f32 %v854, %v2179
    %v2181 = vpop.f32.mrf.mxu0
    %v2182 = vadd.f32 %v856, %v2181
    %2183 = vmatmul.bf16.gmra.mxu0 %v2045
    %v2184 = vpop.f32.mrf.mxu0
    %v2185 = vadd.f32 %v859, %v2184
    %v2186 = vpop.f32.mrf.mxu0
    %v2187 = vadd.f32 %v861, %v2186
    %2188 = vmatmul.bf16.gmra.mxu0 %v2048
    %v2189 = vpop.f32.mrf.mxu0
    %v2190 = vadd.f32 %v864, %v2189
    %v2191 = vpop.f32.mrf.mxu0
    %v2192 = vadd.f32 %v866, %v2191
    %2193 = vdwg.mxu0
    %v2194 = vld [vmem:[%s6] sm:$0xff]
    %v2195 = vld [vmem:[%s6 + $0x8] sm:$0xff]
    %v2196 = vld [vmem:[%s6 + $0x10] sm:$0xff]
    %v2197 = vld [vmem:[%s6 + $0x18] sm:$0xff]
    %v2198 = vld [vmem:[%s6 + $0x20] sm:$0xff]
    %v2199 = vld [vmem:[%s6 + $0x28] sm:$0xff]
    %v2200 = vld [vmem:[%s6 + $0x30] sm:$0xff]
    %v2201 = vld [vmem:[%s6 + $0x38] sm:$0xff]
    %2203 = vset.pattern.permute.xlu0 0
    %2204 = vperm.xlu0 %2203, %v2194
    %v2205 = vpop.permute.xlu0 %2204
    %2208 = vset.pattern.permute.xlu0 0
    %2209 = vperm.xlu0 %2208, %v2195
    %v2210 = vpop.permute.xlu0 %2209
    %2213 = vset.pattern.permute.xlu0 0
    %2214 = vperm.xlu0 %2213, %v2196
    %v2215 = vpop.permute.xlu0 %2214
    %2218 = vset.pattern.permute.xlu0 0
    %2219 = vperm.xlu0 %2218, %v2197
    %v2220 = vpop.permute.xlu0 %2219
    %2223 = vset.pattern.permute.xlu0 0
    %2224 = vperm.xlu0 %2223, %v2198
    %v2225 = vpop.permute.xlu0 %2224
    %2228 = vset.pattern.permute.xlu0 0
    %2229 = vperm.xlu0 %2228, %v2199
    %v2230 = vpop.permute.xlu0 %2229
    %2233 = vset.pattern.permute.xlu0 0
    %2234 = vperm.xlu0 %2233, %v2200
    %v2235 = vpop.permute.xlu0 %2234
    %2238 = vset.pattern.permute.xlu0 0
    %2239 = vperm.xlu0 %2238, %v2201
    %v2240 = vpop.permute.xlu0 %2239
    %v2242 = vadd.f32 %v2117, %v2205
    %v2243 = vadd.f32 %v2146, %v2205
    %v2244 = vadd.f32 %v2175, %v2205
    %v2245 = vadd.f32 %v2119, %v2210
    %v2246 = vadd.f32 %v2148, %v2210
    %v2247 = vadd.f32 %v2177, %v2210
    %v2248 = vadd.f32 %v2122, %v2215
    %v2249 = vadd.f32 %v2151, %v2215
    %v2250 = vadd.f32 %v2180, %v2215
    %v2251 = vadd.f32 %v2124, %v2220
    %v2252 = vadd.f32 %v2153, %v2220
    %v2253 = vadd.f32 %v2182, %v2220
    %v2254 = vadd.f32 %v2127, %v2225
    %v2255 = vadd.f32 %v2156, %v2225
    %v2256 = vadd.f32 %v2185, %v2225
    %v2257 = vadd.f32 %v2129, %v2230
    %v2258 = vadd.f32 %v2158, %v2230
    %v2259 = vadd.f32 %v2187, %v2230
    %v2260 = vadd.f32 %v2132, %v2235
    %v2261 = vadd.f32 %v2161, %v2235
    %v2262 = vadd.f32 %v2190, %v2235
    %v2263 = vadd.f32 %v2134, %v2240
    %v2264 = vadd.f32 %v2163, %v2240
    %v2265 = vadd.f32 %v2192, %v2240
    %v2266 = vmax.f32 %v2242, 0.0
    %v2267 = vmax.f32 %v2243, 0.0
    %v2268 = vmax.f32 %v2244, 0.0
    %v2269 = vmax.f32 %v2245, 0.0
    %v2270 = vmax.f32 %v2246, 0.0
    %v2271 = vmax.f32 %v2247, 0.0
    %v2272 = vmax.f32 %v2248, 0.0
    %v2273 = vmax.f32 %v2249, 0.0
    %v2274 = vmax.f32 %v2250, 0.0
    %v2275 = vmax.f32 %v2251, 0.0
    %v2276 = vmax.f32 %v2252, 0.0
    %v2277 = vmax.f32 %v2253, 0.0
    %v2278 = vmax.f32 %v2254, 0.0
    %v2279 = vmax.f32 %v2255, 0.0
    %v2280 = vmax.f32 %v2256, 0.0
    %v2281 = vmax.f32 %v2257, 0.0
    %v2282 = vmax.f32 %v2258, 0.0
    %v2283 = vmax.f32 %v2259, 0.0
    %v2284 = vmax.f32 %v2260, 0.0
    %v2285 = vmax.f32 %v2261, 0.0
    %v2286 = vmax.f32 %v2262, 0.0
    %v2287 = vmax.f32 %v2263, 0.0
    %v2288 = vmax.f32 %v2264, 0.0
    %v2289 = vmax.f32 %v2265, 0.0
    %v2290 = vld [vmem:[%s7] sm:$0x3]
    %v2291 = vpack.c.bf16 %v2269, %v2266
    %v2292 = vpack.c.bf16 %v2270, %v2267
    %v2293 = vpack.c.bf16 %v2271, %v2268
    %v2294 = vpack.c.bf16 %v2275, %v2272
    %v2295 = vpack.c.bf16 %v2276, %v2273
    %v2296 = vpack.c.bf16 %v2277, %v2274
    %v2297 = vpack.c.bf16 %v2281, %v2278
    %v2298 = vpack.c.bf16 %v2282, %v2279
    %v2299 = vpack.c.bf16 %v2283, %v2280
    %v2300 = vpack.c.bf16 %v2287, %v2284
    %v2301 = vpack.c.bf16 %v2288, %v2285
    %v2302 = vpack.c.bf16 %v2289, %v2286
    %v2303 = vld [vmem:[%s8] sm:$0xf]
    %2305 = vset.pattern.permute.xlu0 0
    %2306 = vperm.xlu0 %2305, %v2303
    %v2307 = vpop.permute.xlu0 %2306
    %vm2309 = vcmask 523264
    %v2311 = vsel %vm2309, %v2290, 0
    %2313 = vmatpush.bf16.msra.mxu0 0
    %2314 = vmatpush.bf16.msra.mxu0 0
    %2315 = vmatpush.bf16.msra.mxu0 0
    %2316 = vmatpush.bf16.msra.mxu0 0
    %2317 = vmatpush.bf16.msra.mxu0 %v2300
    %2318 = vmatpush.bf16.msra.mxu0 %v2297
    %2319 = vmatpush.bf16.msra.mxu0 %v2294
    %2320 = vmatpush.bf16.msra.mxu0 %v2291
    %2321 = vmatmul.bf16.gmra.mxu0 %v2311
    %v2322 = vpop.f32.mrf.mxu0
    %v2323 = vadd.f32 %v2307, %v2322
    %v2324 = vpop.f32.mrf.mxu0
    %2325 = vdwg.mxu0
    %2326 = vmatpush.bf16.msra.mxu0 0
    %2327 = vmatpush.bf16.msra.mxu0 0
    %2328 = vmatpush.bf16.msra.mxu0 0
    %2329 = vmatpush.bf16.msra.mxu0 0
    %2330 = vmatpush.bf16.msra.mxu0 %v2301
    %2331 = vmatpush.bf16.msra.mxu0 %v2298
    %2332 = vmatpush.bf16.msra.mxu0 %v2295
    %2333 = vmatpush.bf16.msra.mxu0 %v2292
    %2334 = vmatmul.bf16.gmra.mxu0 %v2311
    %v2335 = vpop.f32.mrf.mxu0
    %v2336 = vadd.f32 %v2307, %v2335
    %v2337 = vpop.f32.mrf.mxu0
    %2338 = vdwg.mxu0
    %2339 = vmatpush.bf16.msra.mxu0 0
    %2340 = vmatpush.bf16.msra.mxu0 0
    %2341 = vmatpush.bf16.msra.mxu0 0
    %2342 = vmatpush.bf16.msra.mxu0 0
    %2343 = vmatpush.bf16.msra.mxu0 %v2302
    %2344 = vmatpush.bf16.msra.mxu0 %v2299
    %2345 = vmatpush.bf16.msra.mxu0 %v2296
    %2346 = vmatpush.bf16.msra.mxu0 %v2293
    %2347 = vmatmul.bf16.gmra.mxu0 %v2311
    %v2348 = vpop.f32.mrf.mxu0
    %v2349 = vadd.f32 %v2307, %v2348
    %v2350 = vpop.f32.mrf.mxu0
    %2351 = vdwg.mxu0
    %v2354 = vrot.slane %v2336, 4
    %vm2355 = vcmask 1043456
    %v2356 = vsel %vm2355, %v2323, %v2354
    %2358 = vst [vmem:[#allocation2] sm:$0xff] %v2356
    %vm2359 = vcmask 355328
    %2360 = vst.msk [vmem:[#allocation2 + $0x8] sm:$0xf] %vm2359, %v2349
    // Predicated region
    $region38: #{tpu_custom_call.1} parent=1 // pred_check
      _
    $region39: #{tpu_custom_call.1} parent=1 // pred_check_branch
      %2362 = sbr.rel (0) target = $region41
    $region40: #{tpu_custom_call.1} parent=1 // pred_region
      %2364 = vsyncadd [#allocation3], 0
      %s2366 = sshll.u32 [#allocation2], 4
      %s2367 = int_to_ptr.vmem [resolvable:$true] %s2366
      %s2368 = sshll.u32 %s9, 4
      %s2369 = int_to_ptr.hbm [resolvable:$true] %s2368
      %2371 = dma.vmem_to_hbm [thread:$0]  %s2367, 192, %s2369, [#allocation3]
    $region41: #{tpu_custom_call.1} parent=1 // pred_fallthru
      _
    // Predicated region
    $region42: #{tpu_custom_call.1} parent=1 // pred_check
      _
    $region43: #{tpu_custom_call.1} parent=1 // pred_check_branch
      %2373 = sbr.rel (0) target = $region45
    $region44: #{tpu_custom_call.1} parent=1 // pred_region
      %2375 = dma.done [#allocation3], 192
    $region45: #{tpu_custom_call.1} parent=1 // pred_fallthru
      _
    %2376 = vsyncpa [#allocation3], 1

</llo_original>
